<compile_context>
chip_gen: v7x
topology: tpu7x:2x2x1
jax: 0.10.0
libtpu: 0.0.40
codegen_flags: <defaults>
</compile_context>

<pallas_src>
import functools

import jax
import jax.numpy as jnp
from jax.experimental import pallas as pl
from jax.experimental.pallas import tpu as pltpu

LANES = 128              # lane-dense padded feature width
SUBLANES = 8             # f32 sublane granularity
MXU_DTYPE = jnp.bfloat16  # MXU operand dtype (f32 accumulation kept)


def _round_up(n, m):
    return (n + m - 1) // m * m


# ------------------------------ fused kernel -------------------------------

def _gin_fused_kernel(x_ref, adj_ref, pool_ref, w_ref, b_ref, o_ref, *,
                      n_enc, n_conv, mlp_depth, n_dec, eps):
    """enc -> [GINConv]*n_conv -> global_add_pool -> dec, all in VMEM/vregs.

    x_ref:    [n_pad, 128] f32 padded node features.
    adj_ref:  [n_pad, n_pad] bf16 dense adjacency (A[i,j] = #edges j->i).
    pool_ref: [g_pad, n_pad] bf16 graph-pooling matrix.
    w_ref:    [L, 128, 128] bf16 stacked (zero-padded) weights, static index.
    b_ref:    [L, 1, 128]  f32 stacked (zero-padded) biases.
    """
    def dense(h_f32, l, relu):
        # bf16 MXU operands, f32 accumulation, f32 bias+ReLU epilogue on the VPU.
        acc = jnp.dot(h_f32.astype(MXU_DTYPE), w_ref[l],
                      preferred_element_type=jnp.float32)
        acc = acc + b_ref[l]                       # [1, 128] broadcasts over rows
        if relu:
            acc = jnp.maximum(acc, 0.0)
        return acc

    li = 0

    # encoder MLP (last_relu=False)
    x = x_ref[...]
    for i in range(n_enc):
        x = dense(x, li, relu=(i < n_enc - 1))
        li += 1

    # GINConv layers: h = (1+eps)*x + A @ x, then MLP (last_relu=True)
    adj = adj_ref[...]                             # already bf16, loaded once
    for _ in range(n_conv):
        agg = jnp.dot(adj, x.astype(MXU_DTYPE), preferred_element_type=jnp.float32)
        h = (agg + x) if eps == 0.0 else (agg + (1.0 + eps) * x)   # f32 self term
        for i in range(mlp_depth):
            h = dense(h, li, relu=True)
            li += 1
        x = h

    # readout: global_add_pool on the VMEM-resident activations (P @ x)
    g = jnp.dot(pool_ref[...], x.astype(MXU_DTYPE),
                preferred_element_type=jnp.float32)

    # decoder MLP (last_relu=False)
    for i in range(n_dec):
        g = dense(g, li, relu=(i < n_dec - 1))
        li += 1

    o_ref[...] = g.astype(o_ref.dtype)             # single unmasked lane-dense store


# ------------------------------ host wrapper -------------------------------

def gin_forward(x, adj, pool_mat, w_stack, b_stack, *,
                n_enc, n_conv, mlp_depth, n_dec, out_channels, eps=0.0):
    N, C_in = x.shape
    G = pool_mat.shape[0]
    n_pad = _round_up(N, SUBLANES)
    g_pad = _round_up(G, SUBLANES)
    L = w_stack.shape[0]

    # zero-pad to lane/sublane-friendly shapes; padded rows/cols/channels stay
    # zero (or are never read back), so results are identical.
    x_p = jnp.zeros((n_pad, LANES), jnp.float32).at[:N, :C_in].set(x)
    # adjacency entries are small integer edge counts and pool entries are 0/1,
    # both exact in bf16 -> store them as bf16 (half the DMA bytes, no in-kernel cast).
    adj_p = jnp.zeros((n_pad, n_pad), MXU_DTYPE).at[:N, :N].set(adj.astype(MXU_DTYPE))
    pool_p = jnp.zeros((g_pad, n_pad), MXU_DTYPE).at[:G, :N].set(
        pool_mat.astype(MXU_DTYPE))

    kernel = functools.partial(_gin_fused_kernel, n_enc=n_enc, n_conv=n_conv,
                               mlp_depth=mlp_depth, n_dec=n_dec, eps=eps)
    out = pl.pallas_call(
        kernel,
        out_shape=jax.ShapeDtypeStruct((g_pad, LANES), jnp.float32),
        in_specs=[
            pl.BlockSpec((n_pad, LANES), lambda: (0, 0)),          # x
            pl.BlockSpec((n_pad, n_pad), lambda: (0, 0)),          # adjacency
            pl.BlockSpec((g_pad, n_pad), lambda: (0, 0)),          # pooling matrix
            pl.BlockSpec((L, LANES, LANES), lambda: (0, 0, 0)),    # stacked weights
            pl.BlockSpec((L, 1, LANES), lambda: (0, 0, 0)),        # stacked biases
        ],
        out_specs=pl.BlockSpec((g_pad, LANES), lambda: (0, 0)),
        compiler_params=pltpu.CompilerParams(vmem_limit_bytes=32 * 1024 * 1024),
    )(x_p, adj_p, pool_p, w_stack, b_stack)
    return out[:G, :out_channels]


# --------------------------- parameters / packing ---------------------------

def init_linear(key, fan_in, fan_out):
    # deterministic torch.nn.Linear-style init: U(-1/sqrt(fan_in), 1/sqrt(fan_in))
    kw, kb = jax.random.split(key)
    bound = 1.0 / float(fan_in) ** 0.5
    w = jax.random.uniform(kw, (fan_in, fan_out), jnp.float32, -bound, bound)
    b = jax.random.uniform(kb, (fan_out,), jnp.float32, -bound, bound)
    return w, b


def init_mlp(key, input_dim, hidden_dim, mlp_depth, output_dim):
    dims = [input_dim] + [hidden_dim] * (mlp_depth - 1) + [output_dim]
    keys = jax.random.split(key, len(dims) - 1)
    return [init_linear(k, di, do) for k, di, do in zip(keys, dims[:-1], dims[1:])]


def pack_params(params):
    """Stack every Linear into [L,128,128] bf16 weights and [L,1,128] f32 biases."""
    linears = list(params['enc'])
    for conv in params['conv']:
        linears.extend(conv)
    linears.extend(params['dec'])
    ws, bs = [], []
    for w, b in linears:
        wp = jnp.zeros((LANES, LANES), MXU_DTYPE)
        wp = wp.at[:w.shape[0], :w.shape[1]].set(w.astype(MXU_DTYPE))
        bp = jnp.zeros((1, LANES), jnp.float32).at[0, :b.shape[0]].set(b)
        ws.append(wp)
        bs.append(bp)
    return jnp.stack(ws), jnp.stack(bs)


# --------------------------------- main -------------------------------------

if __name__ == "__main__":
    in_channels, hidden_channels, layers, out_channels, mlp_depth = 4, 32, 3, 8, 2
    N, E, G = 16, 40, 2  # nodes, edges, graphs

    key = jax.random.PRNGKey(0)
    k_x, k_src, k_dst, k_p = jax.random.split(key, 4)

    x = jax.random.normal(k_x, (N, in_channels), jnp.float32)
    src = jax.random.randint(k_src, (E,), 0, N)
    dst = jax.random.randint(k_dst, (E,), 0, N)
    edge_index = jnp.stack([src, dst])                               # [2, E]
    batch = jnp.concatenate([jnp.zeros(N // 2, jnp.int32),
                             jnp.ones(N - N // 2, jnp.int32)])       # [N]

    # glue: edge_index scatter-add lowered to a dense adjacency so the GINConv
    # aggregation runs as an MXU matmul inside the fused kernel.
    adj = jnp.zeros((N, N), jnp.float32).at[dst, src].add(1.0)       # A[i,j] = #edges j->i
    pool_mat = (batch[None, :] == jnp.arange(G)[:, None]).astype(jnp.float32)  # [G, N]

    keys = jax.random.split(k_p, layers + 2)
    params = {
        'enc': init_mlp(keys[0], in_channels, hidden_channels, mlp_depth, hidden_channels),
        'conv': [init_mlp(keys[1 + l], hidden_channels, hidden_channels, mlp_depth,
                          hidden_channels) for l in range(layers)],
        'dec': init_mlp(keys[layers + 1], hidden_channels, hidden_channels, mlp_depth,
                        out_channels),
    }
    w_stack, b_stack = pack_params(params)

    fwd = jax.jit(functools.partial(
        gin_forward,
        n_enc=len(params['enc']),
        n_conv=len(params['conv']),
        mlp_depth=mlp_depth,
        n_dec=len(params['dec']),
        out_channels=out_channels,
        eps=0.0,
    ))

    out = fwd(x, adj, pool_mat, w_stack, b_stack)
    out = jax.block_until_ready(out)
    assert out.shape == (G, out_channels) and out.dtype == jnp.float32
    print("KERNEL_OK")
</pallas_src>

<mosaic_0001>
module attributes {stable_mosaic.version = 11 : i64} {
  func.func @_gin_fused_kernel(%arg0: memref<16x128xf32, #tpu.memory_space<vmem>>, %arg1: memref<16x16xbf16, #tpu.memory_space<vmem>>, %arg2: memref<8x16xbf16, #tpu.memory_space<vmem>>, %arg3: memref<10x128x128xbf16, #tpu.memory_space<vmem>>, %arg4: memref<10x1x128xf32, #tpu.memory_space<vmem>>, %arg5: memref<8x128xf32, #tpu.memory_space<vmem>>) attributes {dimension_semantics = [], scalar_prefetch = 0 : i64, scratch_operands = 0 : i64, tpu.core_type = #tpu.core_type<tc>} {
    %c0 = arith.constant 0 : index
    %c0_0 = arith.constant 0 : index
    %0 = vector.load %arg0[%c0, %c0_0] : memref<16x128xf32, #tpu.memory_space<vmem>>, vector<16x128xf32>
    %1 = arith.truncf %0 : vector<16x128xf32> to vector<16x128xbf16>
    %c0_1 = arith.constant 0 : index
    %c0_2 = arith.constant 0 : index
    %c0_3 = arith.constant 0 : index
    %2 = vector.load %arg3[%c0_1, %c0_2, %c0_3] : memref<10x128x128xbf16, #tpu.memory_space<vmem>>, vector<1x128x128xbf16>
    %3 = vector.shape_cast %2 : vector<1x128x128xbf16> to vector<128x128xbf16>
    %cst = arith.constant dense<0.000000e+00> : vector<16x128xf32>
    %4 = tpu.matmul %1, %3, %cst {dimension_numbers = #tpu.dot_dimension_numbers<[1], [0], [0], [1], [0, 0, 1, 1], [], []>} : vector<16x128xbf16>, vector<128x128xbf16>, vector<16x128xf32> -> vector<16x128xf32>
    %c0_4 = arith.constant 0 : index
    %c0_5 = arith.constant 0 : index
    %c0_6 = arith.constant 0 : index
    %5 = vector.load %arg4[%c0_4, %c0_5, %c0_6] : memref<10x1x128xf32, #tpu.memory_space<vmem>>, vector<1x1x128xf32>
    %6 = vector.shape_cast %5 : vector<1x1x128xf32> to vector<1x128xf32>
    %7 = vector.broadcast %6 : vector<1x128xf32> to vector<16x128xf32>
    %8 = arith.addf %4, %7 : vector<16x128xf32>
    %cst_7 = arith.constant 0.000000e+00 : f32
    %9 = vector.broadcast %cst_7 : f32 to vector<16x128xf32>
    %10 = arith.maximumf %8, %9 : vector<16x128xf32>
    %11 = arith.truncf %10 : vector<16x128xf32> to vector<16x128xbf16>
    %c1 = arith.constant 1 : index
    %c0_8 = arith.constant 0 : index
    %c0_9 = arith.constant 0 : index
    %12 = vector.load %arg3[%c1, %c0_8, %c0_9] : memref<10x128x128xbf16, #tpu.memory_space<vmem>>, vector<1x128x128xbf16>
    %13 = vector.shape_cast %12 : vector<1x128x128xbf16> to vector<128x128xbf16>
    %cst_10 = arith.constant dense<0.000000e+00> : vector<16x128xf32>
    %14 = tpu.matmul %11, %13, %cst_10 {dimension_numbers = #tpu.dot_dimension_numbers<[1], [0], [0], [1], [0, 0, 1, 1], [], []>} : vector<16x128xbf16>, vector<128x128xbf16>, vector<16x128xf32> -> vector<16x128xf32>
    %c1_11 = arith.constant 1 : index
    %c0_12 = arith.constant 0 : index
    %c0_13 = arith.constant 0 : index
    %15 = vector.load %arg4[%c1_11, %c0_12, %c0_13] : memref<10x1x128xf32, #tpu.memory_space<vmem>>, vector<1x1x128xf32>
    %16 = vector.shape_cast %15 : vector<1x1x128xf32> to vector<1x128xf32>
    %17 = vector.broadcast %16 : vector<1x128xf32> to vector<16x128xf32>
    %18 = arith.addf %14, %17 : vector<16x128xf32>
    %c0_14 = arith.constant 0 : index
    %c0_15 = arith.constant 0 : index
    %19 = vector.load %arg1[%c0_14, %c0_15] : memref<16x16xbf16, #tpu.memory_space<vmem>>, vector<16x16xbf16>
    %20 = arith.truncf %18 : vector<16x128xf32> to vector<16x128xbf16>
    %cst_16 = arith.constant dense<0.000000e+00> : vector<16x128xf32>
    %21 = tpu.matmul %19, %20, %cst_16 {dimension_numbers = #tpu.dot_dimension_numbers<[1], [0], [0], [1], [0, 0, 1, 1], [], []>} : vector<16x16xbf16>, vector<16x128xbf16>, vector<16x128xf32> -> vector<16x128xf32>
    %22 = arith.addf %21, %18 : vector<16x128xf32>
    %23 = arith.truncf %22 : vector<16x128xf32> to vector<16x128xbf16>
    %c2 = arith.constant 2 : index
    %c0_17 = arith.constant 0 : index
    %c0_18 = arith.constant 0 : index
    %24 = vector.load %arg3[%c2, %c0_17, %c0_18] : memref<10x128x128xbf16, #tpu.memory_space<vmem>>, vector<1x128x128xbf16>
    %25 = vector.shape_cast %24 : vector<1x128x128xbf16> to vector<128x128xbf16>
    %cst_19 = arith.constant dense<0.000000e+00> : vector<16x128xf32>
    %26 = tpu.matmul %23, %25, %cst_19 {dimension_numbers = #tpu.dot_dimension_numbers<[1], [0], [0], [1], [0, 0, 1, 1], [], []>} : vector<16x128xbf16>, vector<128x128xbf16>, vector<16x128xf32> -> vector<16x128xf32>
    %c2_20 = arith.constant 2 : index
    %c0_21 = arith.constant 0 : index
    %c0_22 = arith.constant 0 : index
    %27 = vector.load %arg4[%c2_20, %c0_21, %c0_22] : memref<10x1x128xf32, #tpu.memory_space<vmem>>, vector<1x1x128xf32>
    %28 = vector.shape_cast %27 : vector<1x1x128xf32> to vector<1x128xf32>
    %29 = vector.broadcast %28 : vector<1x128xf32> to vector<16x128xf32>
    %30 = arith.addf %26, %29 : vector<16x128xf32>
    %cst_23 = arith.constant 0.000000e+00 : f32
    %31 = vector.broadcast %cst_23 : f32 to vector<16x128xf32>
    %32 = arith.maximumf %30, %31 : vector<16x128xf32>
    %33 = arith.truncf %32 : vector<16x128xf32> to vector<16x128xbf16>
    %c3 = arith.constant 3 : index
    %c0_24 = arith.constant 0 : index
    %c0_25 = arith.constant 0 : index
    %34 = vector.load %arg3[%c3, %c0_24, %c0_25] : memref<10x128x128xbf16, #tpu.memory_space<vmem>>, vector<1x128x128xbf16>
    %35 = vector.shape_cast %34 : vector<1x128x128xbf16> to vector<128x128xbf16>
    %cst_26 = arith.constant dense<0.000000e+00> : vector<16x128xf32>
    %36 = tpu.matmul %33, %35, %cst_26 {dimension_numbers = #tpu.dot_dimension_numbers<[1], [0], [0], [1], [0, 0, 1, 1], [], []>} : vector<16x128xbf16>, vector<128x128xbf16>, vector<16x128xf32> -> vector<16x128xf32>
    %c3_27 = arith.constant 3 : index
    %c0_28 = arith.constant 0 : index
    %c0_29 = arith.constant 0 : index
    %37 = vector.load %arg4[%c3_27, %c0_28, %c0_29] : memref<10x1x128xf32, #tpu.memory_space<vmem>>, vector<1x1x128xf32>
    %38 = vector.shape_cast %37 : vector<1x1x128xf32> to vector<1x128xf32>
    %39 = vector.broadcast %38 : vector<1x128xf32> to vector<16x128xf32>
    %40 = arith.addf %36, %39 : vector<16x128xf32>
    %cst_30 = arith.constant 0.000000e+00 : f32
    %41 = vector.broadcast %cst_30 : f32 to vector<16x128xf32>
    %42 = arith.maximumf %40, %41 : vector<16x128xf32>
    %43 = arith.truncf %42 : vector<16x128xf32> to vector<16x128xbf16>
    %cst_31 = arith.constant dense<0.000000e+00> : vector<16x128xf32>
    %44 = tpu.matmul %19, %43, %cst_31 {dimension_numbers = #tpu.dot_dimension_numbers<[1], [0], [0], [1], [0, 0, 1, 1], [], []>} : vector<16x16xbf16>, vector<16x128xbf16>, vector<16x128xf32> -> vector<16x128xf32>
    %45 = arith.addf %44, %42 : vector<16x128xf32>
    %46 = arith.truncf %45 : vector<16x128xf32> to vector<16x128xbf16>
    %c4 = arith.constant 4 : index
    %c0_32 = arith.constant 0 : index
    %c0_33 = arith.constant 0 : index
    %47 = vector.load %arg3[%c4, %c0_32, %c0_33] : memref<10x128x128xbf16, #tpu.memory_space<vmem>>, vector<1x128x128xbf16>
    %48 = vector.shape_cast %47 : vector<1x128x128xbf16> to vector<128x128xbf16>
    %cst_34 = arith.constant dense<0.000000e+00> : vector<16x128xf32>
    %49 = tpu.matmul %46, %48, %cst_34 {dimension_numbers = #tpu.dot_dimension_numbers<[1], [0], [0], [1], [0, 0, 1, 1], [], []>} : vector<16x128xbf16>, vector<128x128xbf16>, vector<16x128xf32> -> vector<16x128xf32>
    %c4_35 = arith.constant 4 : index
    %c0_36 = arith.constant 0 : index
    %c0_37 = arith.constant 0 : index
    %50 = vector.load %arg4[%c4_35, %c0_36, %c0_37] : memref<10x1x128xf32, #tpu.memory_space<vmem>>, vector<1x1x128xf32>
    %51 = vector.shape_cast %50 : vector<1x1x128xf32> to vector<1x128xf32>
    %52 = vector.broadcast %51 : vector<1x128xf32> to vector<16x128xf32>
    %53 = arith.addf %49, %52 : vector<16x128xf32>
    %cst_38 = arith.constant 0.000000e+00 : f32
    %54 = vector.broadcast %cst_38 : f32 to vector<16x128xf32>
    %55 = arith.maximumf %53, %54 : vector<16x128xf32>
    %56 = arith.truncf %55 : vector<16x128xf32> to vector<16x128xbf16>
    %c5 = arith.constant 5 : index
    %c0_39 = arith.constant 0 : index
    %c0_40 = arith.constant 0 : index
    %57 = vector.load %arg3[%c5, %c0_39, %c0_40] : memref<10x128x128xbf16, #tpu.memory_space<vmem>>, vector<1x128x128xbf16>
    %58 = vector.shape_cast %57 : vector<1x128x128xbf16> to vector<128x128xbf16>
    %cst_41 = arith.constant dense<0.000000e+00> : vector<16x128xf32>
    %59 = tpu.matmul %56, %58, %cst_41 {dimension_numbers = #tpu.dot_dimension_numbers<[1], [0], [0], [1], [0, 0, 1, 1], [], []>} : vector<16x128xbf16>, vector<128x128xbf16>, vector<16x128xf32> -> vector<16x128xf32>
    %c5_42 = arith.constant 5 : index
    %c0_43 = arith.constant 0 : index
    %c0_44 = arith.constant 0 : index
    %60 = vector.load %arg4[%c5_42, %c0_43, %c0_44] : memref<10x1x128xf32, #tpu.memory_space<vmem>>, vector<1x1x128xf32>
    %61 = vector.shape_cast %60 : vector<1x1x128xf32> to vector<1x128xf32>
    %62 = vector.broadcast %61 : vector<1x128xf32> to vector<16x128xf32>
    %63 = arith.addf %59, %62 : vector<16x128xf32>
    %cst_45 = arith.constant 0.000000e+00 : f32
    %64 = vector.broadcast %cst_45 : f32 to vector<16x128xf32>
    %65 = arith.maximumf %63, %64 : vector<16x128xf32>
    %66 = arith.truncf %65 : vector<16x128xf32> to vector<16x128xbf16>
    %cst_46 = arith.constant dense<0.000000e+00> : vector<16x128xf32>
    %67 = tpu.matmul %19, %66, %cst_46 {dimension_numbers = #tpu.dot_dimension_numbers<[1], [0], [0], [1], [0, 0, 1, 1], [], []>} : vector<16x16xbf16>, vector<16x128xbf16>, vector<16x128xf32> -> vector<16x128xf32>
    %68 = arith.addf %67, %65 : vector<16x128xf32>
    %69 = arith.truncf %68 : vector<16x128xf32> to vector<16x128xbf16>
    %c6 = arith.constant 6 : index
    %c0_47 = arith.constant 0 : index
    %c0_48 = arith.constant 0 : index
    %70 = vector.load %arg3[%c6, %c0_47, %c0_48] : memref<10x128x128xbf16, #tpu.memory_space<vmem>>, vector<1x128x128xbf16>
    %71 = vector.shape_cast %70 : vector<1x128x128xbf16> to vector<128x128xbf16>
    %cst_49 = arith.constant dense<0.000000e+00> : vector<16x128xf32>
    %72 = tpu.matmul %69, %71, %cst_49 {dimension_numbers = #tpu.dot_dimension_numbers<[1], [0], [0], [1], [0, 0, 1, 1], [], []>} : vector<16x128xbf16>, vector<128x128xbf16>, vector<16x128xf32> -> vector<16x128xf32>
    %c6_50 = arith.constant 6 : index
    %c0_51 = arith.constant 0 : index
    %c0_52 = arith.constant 0 : index
    %73 = vector.load %arg4[%c6_50, %c0_51, %c0_52] : memref<10x1x128xf32, #tpu.memory_space<vmem>>, vector<1x1x128xf32>
    %74 = vector.shape_cast %73 : vector<1x1x128xf32> to vector<1x128xf32>
    %75 = vector.broadcast %74 : vector<1x128xf32> to vector<16x128xf32>
    %76 = arith.addf %72, %75 : vector<16x128xf32>
    %cst_53 = arith.constant 0.000000e+00 : f32
    %77 = vector.broadcast %cst_53 : f32 to vector<16x128xf32>
    %78 = arith.maximumf %76, %77 : vector<16x128xf32>
    %79 = arith.truncf %78 : vector<16x128xf32> to vector<16x128xbf16>
    %c7 = arith.constant 7 : index
    %c0_54 = arith.constant 0 : index
    %c0_55 = arith.constant 0 : index
    %80 = vector.load %arg3[%c7, %c0_54, %c0_55] : memref<10x128x128xbf16, #tpu.memory_space<vmem>>, vector<1x128x128xbf16>
    %81 = vector.shape_cast %80 : vector<1x128x128xbf16> to vector<128x128xbf16>
    %cst_56 = arith.constant dense<0.000000e+00> : vector<16x128xf32>
    %82 = tpu.matmul %79, %81, %cst_56 {dimension_numbers = #tpu.dot_dimension_numbers<[1], [0], [0], [1], [0, 0, 1, 1], [], []>} : vector<16x128xbf16>, vector<128x128xbf16>, vector<16x128xf32> -> vector<16x128xf32>
    %c7_57 = arith.constant 7 : index
    %c0_58 = arith.constant 0 : index
    %c0_59 = arith.constant 0 : index
    %83 = vector.load %arg4[%c7_57, %c0_58, %c0_59] : memref<10x1x128xf32, #tpu.memory_space<vmem>>, vector<1x1x128xf32>
    %84 = vector.shape_cast %83 : vector<1x1x128xf32> to vector<1x128xf32>
    %85 = vector.broadcast %84 : vector<1x128xf32> to vector<16x128xf32>
    %86 = arith.addf %82, %85 : vector<16x128xf32>
    %cst_60 = arith.constant 0.000000e+00 : f32
    %87 = vector.broadcast %cst_60 : f32 to vector<16x128xf32>
    %88 = arith.maximumf %86, %87 : vector<16x128xf32>
    %c0_61 = arith.constant 0 : index
    %c0_62 = arith.constant 0 : index
    %89 = vector.load %arg2[%c0_61, %c0_62] : memref<8x16xbf16, #tpu.memory_space<vmem>>, vector<8x16xbf16>
    %90 = arith.truncf %88 : vector<16x128xf32> to vector<16x128xbf16>
    %cst_63 = arith.constant dense<0.000000e+00> : vector<8x128xf32>
    %91 = tpu.matmul %89, %90, %cst_63 {dimension_numbers = #tpu.dot_dimension_numbers<[1], [0], [0], [1], [0, 0, 1, 1], [], []>} : vector<8x16xbf16>, vector<16x128xbf16>, vector<8x128xf32> -> vector<8x128xf32>
    %92 = arith.truncf %91 : vector<8x128xf32> to vector<8x128xbf16>
    %c8 = arith.constant 8 : index
    %c0_64 = arith.constant 0 : index
    %c0_65 = arith.constant 0 : index
    %93 = vector.load %arg3[%c8, %c0_64, %c0_65] : memref<10x128x128xbf16, #tpu.memory_space<vmem>>, vector<1x128x128xbf16>
    %94 = vector.shape_cast %93 : vector<1x128x128xbf16> to vector<128x128xbf16>
    %cst_66 = arith.constant dense<0.000000e+00> : vector<8x128xf32>
    %95 = tpu.matmul %92, %94, %cst_66 {dimension_numbers = #tpu.dot_dimension_numbers<[1], [0], [0], [1], [0, 0, 1, 1], [], []>} : vector<8x128xbf16>, vector<128x128xbf16>, vector<8x128xf32> -> vector<8x128xf32>
    %c8_67 = arith.constant 8 : index
    %c0_68 = arith.constant 0 : index
    %c0_69 = arith.constant 0 : index
    %96 = vector.load %arg4[%c8_67, %c0_68, %c0_69] : memref<10x1x128xf32, #tpu.memory_space<vmem>>, vector<1x1x128xf32>
    %97 = vector.shape_cast %96 : vector<1x1x128xf32> to vector<1x128xf32>
    %98 = vector.broadcast %97 : vector<1x128xf32> to vector<8x128xf32>
    %99 = arith.addf %95, %98 : vector<8x128xf32>
    %cst_70 = arith.constant 0.000000e+00 : f32
    %100 = vector.broadcast %cst_70 : f32 to vector<8x128xf32>
    %101 = arith.maximumf %99, %100 : vector<8x128xf32>
    %102 = arith.truncf %101 : vector<8x128xf32> to vector<8x128xbf16>
    %c9 = arith.constant 9 : index
    %c0_71 = arith.constant 0 : index
    %c0_72 = arith.constant 0 : index
    %103 = vector.load %arg3[%c9, %c0_71, %c0_72] : memref<10x128x128xbf16, #tpu.memory_space<vmem>>, vector<1x128x128xbf16>
    %104 = vector.shape_cast %103 : vector<1x128x128xbf16> to vector<128x128xbf16>
    %cst_73 = arith.constant dense<0.000000e+00> : vector<8x128xf32>
    %105 = tpu.matmul %102, %104, %cst_73 {dimension_numbers = #tpu.dot_dimension_numbers<[1], [0], [0], [1], [0, 0, 1, 1], [], []>} : vector<8x128xbf16>, vector<128x128xbf16>, vector<8x128xf32> -> vector<8x128xf32>
    %c9_74 = arith.constant 9 : index
    %c0_75 = arith.constant 0 : index
    %c0_76 = arith.constant 0 : index
    %106 = vector.load %arg4[%c9_74, %c0_75, %c0_76] : memref<10x1x128xf32, #tpu.memory_space<vmem>>, vector<1x1x128xf32>
    %107 = vector.shape_cast %106 : vector<1x1x128xf32> to vector<1x128xf32>
    %108 = vector.broadcast %107 : vector<1x128xf32> to vector<8x128xf32>
    %109 = arith.addf %105, %108 : vector<8x128xf32>
    %c0_77 = arith.constant 0 : index
    %c0_78 = arith.constant 0 : index
    %110 = vector.load %arg5[%c0_77, %c0_78] : memref<8x128xf32, #tpu.memory_space<vmem>>, vector<8x128xf32>
    tpu.vector_store %arg5[%c0_77, %c0_78], %109 {strides = array<i32>} : memref<8x128xf32, #tpu.memory_space<vmem>>, vector<8x128xf32>,
    return
  }
}

</mosaic_0001>

<llo_original>
// kernel: gin_forward.1
$region0: #{gin_forward.1}
  #allocation0 [shape = 'u32[]', space=smem, size = 0x4, offset = 0x4, fixed_abs, tag = 'smem constant byte address 0x4 - core index']
  #allocation1 [shape = 'u32[144,128]{1,0:T(1,128)}', space=vmem, size = 0x12000, scoped, tag = 'internal scratch']
  %s0 = inlined_call_operand.vmem [shape: f32[16,128], index: 0, kind: input, shape index: {}]
  %s1 = inlined_call_operand.vmem [shape: bf16[16,16], index: 1, kind: input, shape index: {}]
  %s2 = inlined_call_operand.vmem [shape: bf16[8,16], index: 2, kind: input, shape index: {}]
  %s3 = inlined_call_operand.hbm [shape: bf16[10,128,128], index: 3, kind: input, shape index: {}]
  %s4 = inlined_call_operand.vmem [shape: f32[10,1,128], index: 4, kind: input, shape index: {}]
  %s5 = inlined_call_operand.vmem [shape: f32[8,128], index: 5, kind: output, shape index: {}]
  %s6 = sld [smem:[#allocation0]]
  $region34: #{gin_forward.1} parent=0
    _
  %s8 = ssub.s32 1, %s6
  %s9 = scalar_select 0, %s8, %s6
  $region1: #{gin_forward.1} parent=0
    #allocation2 [shape = 'u8[327680]{0}', space=vmem, size = 0x50000, scoped, tag = 'input window, operand 3, single buffered']
    #allocation3 [shape = 's32[1]{0}', space=sflag, size = 0x4, scoped, tag = 'scoped memory for gin_forward.1']
    %10 = vsyncpa [#allocation3], 0
    // Predicated region
    $region2: #{gin_forward.1} parent=1 // pred_check
      _
    $region3: #{gin_forward.1} parent=1 // pred_check_branch
      %12 = sbr.rel (0) target = $region5
    $region4: #{gin_forward.1} parent=1 // pred_region
      _
    $region5: #{gin_forward.1} parent=1 // pred_fallthru
      _
    // Predicated region
    $region6: #{gin_forward.1} parent=1 // pred_check
      _
    $region7: #{gin_forward.1} parent=1 // pred_check_branch
      %14 = sbr.rel (0) target = $region9
    $region8: #{gin_forward.1} parent=1 // pred_region
      _
    $region9: #{gin_forward.1} parent=1 // pred_fallthru
      _
    // Predicated region
    $region10: #{gin_forward.1} parent=1 // pred_check
      _
    $region11: #{gin_forward.1} parent=1 // pred_check_branch
      %16 = sbr.rel (0) target = $region13
    $region12: #{gin_forward.1} parent=1 // pred_region
      _
    $region13: #{gin_forward.1} parent=1 // pred_fallthru
      _
    // Predicated region
    $region14: #{gin_forward.1} parent=1 // pred_check
      _
    $region15: #{gin_forward.1} parent=1 // pred_check_branch
      %18 = sbr.rel (0) target = $region17
    $region16: #{gin_forward.1} parent=1 // pred_region
      %s20 = ssub.s32 10240, 10240
      %21 = vsyncadd [#allocation3], %s20
      %s22 = sshll.u32 [#allocation2], 4
      %s23 = int_to_ptr.vmem [resolvable:$true] %s22
      %28 = dma.hbm_to_vmem [thread:$0]  %s3, 10240, %s23, [#allocation3], 64, 64, 4
    $region17: #{gin_forward.1} parent=1 // pred_fallthru
      _
    // Predicated region
    $region18: #{gin_forward.1} parent=1 // pred_check
      _
    $region19: #{gin_forward.1} parent=1 // pred_check_branch
      %30 = sbr.rel (0) target = $region21
    $region20: #{gin_forward.1} parent=1 // pred_region
      _
    $region21: #{gin_forward.1} parent=1 // pred_fallthru
      _
    // Predicated region
    $region22: #{gin_forward.1} parent=1 // pred_check
      _
    $region23: #{gin_forward.1} parent=1 // pred_check_branch
      %32 = sbr.rel (0) target = $region25
    $region24: #{gin_forward.1} parent=1 // pred_region
      %33 = dma.done [#allocation3], 10240
    $region25: #{gin_forward.1} parent=1 // pred_fallthru
      _
    %v35 = vld [vmem:[%s0] sm:$0xff]
    %v36 = vld [vmem:[%s0 + $0x8] sm:$0xff]
    %v37 = vpack.c.bf16 %v36, %v35
    %v38 = vld [vmem:[#allocation2] sm:$0xf]
    %v39 = vld [vmem:[#allocation2 + $0x4] sm:$0xf]
    %v40 = vld [vmem:[#allocation2 + $0x8] sm:$0xf]
    %v41 = vld [vmem:[#allocation2 + $0xc] sm:$0xf]
    %v42 = vld [vmem:[#allocation2 + $0x10] sm:$0xf]
    %v43 = vld [vmem:[#allocation2 + $0x14] sm:$0xf]
    %v44 = vld [vmem:[#allocation2 + $0x18] sm:$0xf]
    %v45 = vld [vmem:[#allocation2 + $0x1c] sm:$0xf]
    %v46 = vld [vmem:[#allocation2 + $0x20] sm:$0xf]
    %v47 = vld [vmem:[#allocation2 + $0x24] sm:$0xf]
    %v48 = vld [vmem:[#allocation2 + $0x28] sm:$0xf]
    %v49 = vld [vmem:[#allocation2 + $0x2c] sm:$0xf]
    %v50 = vld [vmem:[#allocation2 + $0x30] sm:$0xf]
    %v51 = vld [vmem:[#allocation2 + $0x34] sm:$0xf]
    %v52 = vld [vmem:[#allocation2 + $0x38] sm:$0xf]
    %v53 = vld [vmem:[#allocation2 + $0x3c] sm:$0xf]
    %v54 = vld [vmem:[%s4] sm:$0x1]
    %v56 = vlaneseq
    %v57 = vshrl.u32 %v56, 7
    %v58 = vsub.s32 0, %v57
    %v59 = vrot.slane %v54, %v58
    %v77 = vunpack.c.l.b16 %v38
    %v78 = vunpack.c.l.b16 %v39
    %v79 = vunpack.c.l.b16 %v40
    %v80 = vunpack.c.l.b16 %v41
    %v81 = vunpack.c.l.b16 %v42
    %v82 = vunpack.c.l.b16 %v43
    %v83 = vunpack.c.l.b16 %v44
    %v84 = vunpack.c.l.b16 %v45
    %v85 = vunpack.c.l.b16 %v46
    %v86 = vunpack.c.l.b16 %v47
    %v87 = vunpack.c.l.b16 %v48
    %v88 = vunpack.c.l.b16 %v49
    %v89 = vunpack.c.l.b16 %v50
    %v90 = vunpack.c.l.b16 %v51
    %v91 = vunpack.c.l.b16 %v52
    %v92 = vunpack.c.l.b16 %v53
    %v93 = vpack.c.b16 %v78, %v77
    %v94 = vpack.c.b16 %v80, %v79
    %v95 = vpack.c.b16 %v82, %v81
    %v96 = vpack.c.b16 %v84, %v83
    %v97 = vpack.c.b16 %v86, %v85
    %v98 = vpack.c.b16 %v88, %v87
    %v99 = vpack.c.b16 %v90, %v89
    %v100 = vpack.c.b16 %v92, %v91
    %109 = vmatprep.subr.bf16.mxu0 0
    %110 = vmatpush1.bf16.msra.mxu0 %v93
    %111 = vmatprep.subr.bf16.mxu0 0
    %112 = vmatpush1.bf16.msra.mxu0 %v94
    %113 = vmatprep.subr.bf16.mxu0 0
    %114 = vmatpush1.bf16.msra.mxu0 %v95
    %115 = vmatprep.subr.bf16.mxu0 0
    %116 = vmatpush1.bf16.msra.mxu0 %v96
    %117 = vmatprep.subr.bf16.mxu0 0
    %118 = vmatpush1.bf16.msra.mxu0 %v97
    %119 = vmatprep.subr.bf16.mxu0 0
    %120 = vmatpush1.bf16.msra.mxu0 %v98
    %121 = vmatprep.subr.bf16.mxu0 0
    %122 = vmatpush1.bf16.msra.mxu0 %v99
    %123 = vmatprep.subr.bf16.mxu0 0
    %124 = vmatpush1.bf16.msra.mxu0 %v100
    %125 = vmatprep.subr.bf16.mxu0 0
    %126 = vmatpush1.bf16.msra.mxu0 0
    %127 = vmatprep.subr.bf16.mxu0 0
    %128 = vmatpush1.bf16.msra.mxu0 0
    %129 = vmatprep.subr.bf16.mxu0 0
    %130 = vmatpush1.bf16.msra.mxu0 0
    %131 = vmatprep.subr.bf16.mxu0 0
    %132 = vmatpush1.bf16.msra.mxu0 0
    %133 = vmatprep.subr.bf16.mxu0 0
    %134 = vmatpush1.bf16.msra.mxu0 0
    %135 = vmatprep.subr.bf16.mxu0 0
    %136 = vmatpush1.bf16.msra.mxu0 0
    %137 = vmatprep.subr.bf16.mxu0 0
    %138 = vmatpush1.bf16.msra.mxu0 0
    %139 = vmatprep.subr.bf16.mxu0 0
    %140 = vmatpush1.bf16.msra.mxu0 0
    %141 = vmatprep.mubr.bf16.mxu0 0
    %142 = vmatmul.mubr.bf16.gmra.mrb[0].mxu0 %v37
    %v143 = vpop.f32.mrb[0].mxu0
    %v144 = vadd.f32 %v59, %v143
    %v145 = vpop.f32.mrb[0].mxu0
    %v146 = vpop.f32.mrb[0].mxu0
    %v147 = vadd.f32 %v59, %v146
    %v148 = vpop.f32.mrb[0].mxu0
    %149 = vdwg.mxu0
    %v150 = vmax.f32 %v144, 0.0
    %v151 = vmax.f32 %v147, 0.0
    %v152 = vpack.c.bf16 %v151, %v150
    %s153 = scalar_lea.vmem [#allocation2], 64
    %v154 = vld [vmem:[%s153] sm:$0xf]
    %v155 = vld [vmem:[%s153 + $0x4] sm:$0xf]
    %v156 = vld [vmem:[%s153 + $0x8] sm:$0xf]
    %v157 = vld [vmem:[%s153 + $0xc] sm:$0xf]
    %v158 = vld [vmem:[%s153 + $0x10] sm:$0xf]
    %v159 = vld [vmem:[%s153 + $0x14] sm:$0xf]
    %v160 = vld [vmem:[%s153 + $0x18] sm:$0xf]
    %v161 = vld [vmem:[%s153 + $0x1c] sm:$0xf]
    %v162 = vld [vmem:[%s153 + $0x20] sm:$0xf]
    %v163 = vld [vmem:[%s153 + $0x24] sm:$0xf]
    %v164 = vld [vmem:[%s153 + $0x28] sm:$0xf]
    %v165 = vld [vmem:[%s153 + $0x2c] sm:$0xf]
    %v166 = vld [vmem:[%s153 + $0x30] sm:$0xf]
    %v167 = vld [vmem:[%s153 + $0x34] sm:$0xf]
    %v168 = vld [vmem:[%s153 + $0x38] sm:$0xf]
    %v169 = vld [vmem:[%s153 + $0x3c] sm:$0xf]
    %s170 = scalar_lea.vmem %s4, 1
    %v171 = vld [vmem:[%s170] sm:$0x1]
    %v173 = vlaneseq
    %v174 = vshrl.u32 %v173, 7
    %v175 = vsub.s32 0, %v174
    %v176 = vrot.slane %v171, %v175
    %v194 = vunpack.c.l.b16 %v154
    %v195 = vunpack.c.l.b16 %v155
    %v196 = vunpack.c.l.b16 %v156
    %v197 = vunpack.c.l.b16 %v157
    %v198 = vunpack.c.l.b16 %v158
    %v199 = vunpack.c.l.b16 %v159
    %v200 = vunpack.c.l.b16 %v160
    %v201 = vunpack.c.l.b16 %v161
    %v202 = vunpack.c.l.b16 %v162
    %v203 = vunpack.c.l.b16 %v163
    %v204 = vunpack.c.l.b16 %v164
    %v205 = vunpack.c.l.b16 %v165
    %v206 = vunpack.c.l.b16 %v166
    %v207 = vunpack.c.l.b16 %v167
    %v208 = vunpack.c.l.b16 %v168
    %v209 = vunpack.c.l.b16 %v169
    %v210 = vpack.c.b16 %v195, %v194
    %v211 = vpack.c.b16 %v197, %v196
    %v212 = vpack.c.b16 %v199, %v198
    %v213 = vpack.c.b16 %v201, %v200
    %v214 = vpack.c.b16 %v203, %v202
    %v215 = vpack.c.b16 %v205, %v204
    %v216 = vpack.c.b16 %v207, %v206
    %v217 = vpack.c.b16 %v209, %v208
    %226 = vmatprep.subr.bf16.mxu0 0
    %227 = vmatpush1.bf16.msra.mxu0 %v210
    %228 = vmatprep.subr.bf16.mxu0 0
    %229 = vmatpush1.bf16.msra.mxu0 %v211
    %230 = vmatprep.subr.bf16.mxu0 0
    %231 = vmatpush1.bf16.msra.mxu0 %v212
    %232 = vmatprep.subr.bf16.mxu0 0
    %233 = vmatpush1.bf16.msra.mxu0 %v213
    %234 = vmatprep.subr.bf16.mxu0 0
    %235 = vmatpush1.bf16.msra.mxu0 %v214
    %236 = vmatprep.subr.bf16.mxu0 0
    %237 = vmatpush1.bf16.msra.mxu0 %v215
    %238 = vmatprep.subr.bf16.mxu0 0
    %239 = vmatpush1.bf16.msra.mxu0 %v216
    %240 = vmatprep.subr.bf16.mxu0 0
    %241 = vmatpush1.bf16.msra.mxu0 %v217
    %242 = vmatprep.subr.bf16.mxu0 0
    %243 = vmatpush1.bf16.msra.mxu0 0
    %244 = vmatprep.subr.bf16.mxu0 0
    %245 = vmatpush1.bf16.msra.mxu0 0
    %246 = vmatprep.subr.bf16.mxu0 0
    %247 = vmatpush1.bf16.msra.mxu0 0
    %248 = vmatprep.subr.bf16.mxu0 0
    %249 = vmatpush1.bf16.msra.mxu0 0
    %250 = vmatprep.subr.bf16.mxu0 0
    %251 = vmatpush1.bf16.msra.mxu0 0
    %252 = vmatprep.subr.bf16.mxu0 0
    %253 = vmatpush1.bf16.msra.mxu0 0
    %254 = vmatprep.subr.bf16.mxu0 0
    %255 = vmatpush1.bf16.msra.mxu0 0
    %256 = vmatprep.subr.bf16.mxu0 0
    %257 = vmatpush1.bf16.msra.mxu0 0
    %258 = vmatprep.mubr.bf16.mxu0 0
    %259 = vmatmul.mubr.bf16.gmra.mrb[0].mxu0 %v152
    %v260 = vpop.f32.mrb[0].mxu0
    %v261 = vadd.f32 %v176, %v260
    %v262 = vpop.f32.mrb[0].mxu0
    %v263 = vpop.f32.mrb[0].mxu0
    %v264 = vadd.f32 %v176, %v263
    %v265 = vpop.f32.mrb[0].mxu0
    %266 = vdwg.mxu0
    %v267 = vld [vmem:[%s1] sm:$0xf]
    %v268 = vld [vmem:[%s1 + $0x4] sm:$0xf]
    %v269 = vpack.c.bf16 %v264, %v261
    %v272 = vunpack.c.l.b16 %v267
    %v273 = vunpack.c.l.b16 %v268
    %v274 = vpack.c.b16 %v273, %v272
    %vm275 = vcmask 130048
    %v277 = vsel %vm275, %v274, 0
    %279 = vmatprep.subr.bf16.mxu0 0
    %280 = vmatpush1.bf16.msra.mxu0 %v269
    %281 = vmatprep.subr.bf16.mxu0 0
    %282 = vmatpush1.bf16.msra.mxu0 0
    %283 = vmatprep.subr.bf16.mxu0 0
    %284 = vmatpush1.bf16.msra.mxu0 0
    %285 = vmatprep.subr.bf16.mxu0 0
    %286 = vmatpush1.bf16.msra.mxu0 0
    %287 = vmatprep.subr.bf16.mxu0 0
    %288 = vmatpush1.bf16.msra.mxu0 0
    %289 = vmatprep.subr.bf16.mxu0 0
    %290 = vmatpush1.bf16.msra.mxu0 0
    %291 = vmatprep.subr.bf16.mxu0 0
    %292 = vmatpush1.bf16.msra.mxu0 0
    %293 = vmatprep.subr.bf16.mxu0 0
    %294 = vmatpush1.bf16.msra.mxu0 0
    %295 = vmatprep.subr.bf16.mxu0 0
    %296 = vmatpush1.bf16.msra.mxu0 0
    %297 = vmatprep.subr.bf16.mxu0 0
    %298 = vmatpush1.bf16.msra.mxu0 0
    %299 = vmatprep.subr.bf16.mxu0 0
    %300 = vmatpush1.bf16.msra.mxu0 0
    %301 = vmatprep.subr.bf16.mxu0 0
    %302 = vmatpush1.bf16.msra.mxu0 0
    %303 = vmatprep.subr.bf16.mxu0 0
    %304 = vmatpush1.bf16.msra.mxu0 0
    %305 = vmatprep.subr.bf16.mxu0 0
    %306 = vmatpush1.bf16.msra.mxu0 0
    %307 = vmatprep.subr.bf16.mxu0 0
    %308 = vmatpush1.bf16.msra.mxu0 0
    %309 = vmatprep.subr.bf16.mxu0 0
    %310 = vmatpush1.bf16.msra.mxu0 0
    %311 = vmatprep.mubr.bf16.mxu0 0
    %312 = vmatmul.mubr.bf16.gmra.mrb[0].mxu0 %v277
    %v313 = vpop.f32.mrb[0].mxu0
    %v314 = vadd.f32 %v261, %v313
    %v315 = vpop.f32.mrb[0].mxu0
    %v316 = vpop.f32.mrb[0].mxu0
    %v317 = vadd.f32 %v264, %v316
    %v318 = vpop.f32.mrb[0].mxu0
    %319 = vdwg.mxu0
    %v320 = vpack.c.bf16 %v317, %v314
    %s321 = scalar_lea.vmem [#allocation2], 128
    %v322 = vld [vmem:[%s321] sm:$0xf]
    %v323 = vld [vmem:[%s321 + $0x4] sm:$0xf]
    %v324 = vld [vmem:[%s321 + $0x8] sm:$0xf]
    %v325 = vld [vmem:[%s321 + $0xc] sm:$0xf]
    %v326 = vld [vmem:[%s321 + $0x10] sm:$0xf]
    %v327 = vld [vmem:[%s321 + $0x14] sm:$0xf]
    %v328 = vld [vmem:[%s321 + $0x18] sm:$0xf]
    %v329 = vld [vmem:[%s321 + $0x1c] sm:$0xf]
    %v330 = vld [vmem:[%s321 + $0x20] sm:$0xf]
    %v331 = vld [vmem:[%s321 + $0x24] sm:$0xf]
    %v332 = vld [vmem:[%s321 + $0x28] sm:$0xf]
    %v333 = vld [vmem:[%s321 + $0x2c] sm:$0xf]
    %v334 = vld [vmem:[%s321 + $0x30] sm:$0xf]
    %v335 = vld [vmem:[%s321 + $0x34] sm:$0xf]
    %v336 = vld [vmem:[%s321 + $0x38] sm:$0xf]
    %v337 = vld [vmem:[%s321 + $0x3c] sm:$0xf]
    %s338 = scalar_lea.vmem %s4, 2
    %v339 = vld [vmem:[%s338] sm:$0x1]
    %v341 = vlaneseq
    %v342 = vshrl.u32 %v341, 7
    %v343 = vsub.s32 0, %v342
    %v344 = vrot.slane %v339, %v343
    %v362 = vunpack.c.l.b16 %v322
    %v363 = vunpack.c.l.b16 %v323
    %v364 = vunpack.c.l.b16 %v324
    %v365 = vunpack.c.l.b16 %v325
    %v366 = vunpack.c.l.b16 %v326
    %v367 = vunpack.c.l.b16 %v327
    %v368 = vunpack.c.l.b16 %v328
    %v369 = vunpack.c.l.b16 %v329
    %v370 = vunpack.c.l.b16 %v330
    %v371 = vunpack.c.l.b16 %v331
    %v372 = vunpack.c.l.b16 %v332
    %v373 = vunpack.c.l.b16 %v333
    %v374 = vunpack.c.l.b16 %v334
    %v375 = vunpack.c.l.b16 %v335
    %v376 = vunpack.c.l.b16 %v336
    %v377 = vunpack.c.l.b16 %v337
    %v378 = vpack.c.b16 %v363, %v362
    %v379 = vpack.c.b16 %v365, %v364
    %v380 = vpack.c.b16 %v367, %v366
    %v381 = vpack.c.b16 %v369, %v368
    %v382 = vpack.c.b16 %v371, %v370
    %v383 = vpack.c.b16 %v373, %v372
    %v384 = vpack.c.b16 %v375, %v374
    %v385 = vpack.c.b16 %v377, %v376
    %394 = vmatprep.subr.bf16.mxu0 0
    %395 = vmatpush1.bf16.msra.mxu0 %v378
    %396 = vmatprep.subr.bf16.mxu0 0
    %397 = vmatpush1.bf16.msra.mxu0 %v379
    %398 = vmatprep.subr.bf16.mxu0 0
    %399 = vmatpush1.bf16.msra.mxu0 %v380
    %400 = vmatprep.subr.bf16.mxu0 0
    %401 = vmatpush1.bf16.msra.mxu0 %v381
    %402 = vmatprep.subr.bf16.mxu0 0
    %403 = vmatpush1.bf16.msra.mxu0 %v382
    %404 = vmatprep.subr.bf16.mxu0 0
    %405 = vmatpush1.bf16.msra.mxu0 %v383
    %406 = vmatprep.subr.bf16.mxu0 0
    %407 = vmatpush1.bf16.msra.mxu0 %v384
    %408 = vmatprep.subr.bf16.mxu0 0
    %409 = vmatpush1.bf16.msra.mxu0 %v385
    %410 = vmatprep.subr.bf16.mxu0 0
    %411 = vmatpush1.bf16.msra.mxu0 0
    %412 = vmatprep.subr.bf16.mxu0 0
    %413 = vmatpush1.bf16.msra.mxu0 0
    %414 = vmatprep.subr.bf16.mxu0 0
    %415 = vmatpush1.bf16.msra.mxu0 0
    %416 = vmatprep.subr.bf16.mxu0 0
    %417 = vmatpush1.bf16.msra.mxu0 0
    %418 = vmatprep.subr.bf16.mxu0 0
    %419 = vmatpush1.bf16.msra.mxu0 0
    %420 = vmatprep.subr.bf16.mxu0 0
    %421 = vmatpush1.bf16.msra.mxu0 0
    %422 = vmatprep.subr.bf16.mxu0 0
    %423 = vmatpush1.bf16.msra.mxu0 0
    %424 = vmatprep.subr.bf16.mxu0 0
    %425 = vmatpush1.bf16.msra.mxu0 0
    %426 = vmatprep.mubr.bf16.mxu0 0
    %427 = vmatmul.mubr.bf16.gmra.mrb[0].mxu0 %v320
    %v428 = vpop.f32.mrb[0].mxu0
    %v429 = vadd.f32 %v344, %v428
    %v430 = vpop.f32.mrb[0].mxu0
    %v431 = vpop.f32.mrb[0].mxu0
    %v432 = vadd.f32 %v344, %v431
    %v433 = vpop.f32.mrb[0].mxu0
    %434 = vdwg.mxu0
    %v435 = vmax.f32 %v429, 0.0
    %v436 = vmax.f32 %v432, 0.0
    %v437 = vpack.c.bf16 %v436, %v435
    %s438 = scalar_lea.vmem [#allocation2], 192
    %v439 = vld [vmem:[%s438] sm:$0xf]
    %v440 = vld [vmem:[%s438 + $0x4] sm:$0xf]
    %v441 = vld [vmem:[%s438 + $0x8] sm:$0xf]
    %v442 = vld [vmem:[%s438 + $0xc] sm:$0xf]
    %v443 = vld [vmem:[%s438 + $0x10] sm:$0xf]
    %v444 = vld [vmem:[%s438 + $0x14] sm:$0xf]
    %v445 = vld [vmem:[%s438 + $0x18] sm:$0xf]
    %v446 = vld [vmem:[%s438 + $0x1c] sm:$0xf]
    %v447 = vld [vmem:[%s438 + $0x20] sm:$0xf]
    %v448 = vld [vmem:[%s438 + $0x24] sm:$0xf]
    %v449 = vld [vmem:[%s438 + $0x28] sm:$0xf]
    %v450 = vld [vmem:[%s438 + $0x2c] sm:$0xf]
    %v451 = vld [vmem:[%s438 + $0x30] sm:$0xf]
    %v452 = vld [vmem:[%s438 + $0x34] sm:$0xf]
    %v453 = vld [vmem:[%s438 + $0x38] sm:$0xf]
    %v454 = vld [vmem:[%s438 + $0x3c] sm:$0xf]
    %s455 = scalar_lea.vmem %s4, 3
    %v456 = vld [vmem:[%s455] sm:$0x1]
    %v458 = vlaneseq
    %v459 = vshrl.u32 %v458, 7
    %v460 = vsub.s32 0, %v459
    %v461 = vrot.slane %v456, %v460
    %v479 = vunpack.c.l.b16 %v439
    %v480 = vunpack.c.l.b16 %v440
    %v481 = vunpack.c.l.b16 %v441
    %v482 = vunpack.c.l.b16 %v442
    %v483 = vunpack.c.l.b16 %v443
    %v484 = vunpack.c.l.b16 %v444
    %v485 = vunpack.c.l.b16 %v445
    %v486 = vunpack.c.l.b16 %v446
    %v487 = vunpack.c.l.b16 %v447
    %v488 = vunpack.c.l.b16 %v448
    %v489 = vunpack.c.l.b16 %v449
    %v490 = vunpack.c.l.b16 %v450
    %v491 = vunpack.c.l.b16 %v451
    %v492 = vunpack.c.l.b16 %v452
    %v493 = vunpack.c.l.b16 %v453
    %v494 = vunpack.c.l.b16 %v454
    %v495 = vpack.c.b16 %v480, %v479
    %v496 = vpack.c.b16 %v482, %v481
    %v497 = vpack.c.b16 %v484, %v483
    %v498 = vpack.c.b16 %v486, %v485
    %v499 = vpack.c.b16 %v488, %v487
    %v500 = vpack.c.b16 %v490, %v489
    %v501 = vpack.c.b16 %v492, %v491
    %v502 = vpack.c.b16 %v494, %v493
    %511 = vmatprep.subr.bf16.mxu0 0
    %512 = vmatpush1.bf16.msra.mxu0 %v495
    %513 = vmatprep.subr.bf16.mxu0 0
    %514 = vmatpush1.bf16.msra.mxu0 %v496
    %515 = vmatprep.subr.bf16.mxu0 0
    %516 = vmatpush1.bf16.msra.mxu0 %v497
    %517 = vmatprep.subr.bf16.mxu0 0
    %518 = vmatpush1.bf16.msra.mxu0 %v498
    %519 = vmatprep.subr.bf16.mxu0 0
    %520 = vmatpush1.bf16.msra.mxu0 %v499
    %521 = vmatprep.subr.bf16.mxu0 0
    %522 = vmatpush1.bf16.msra.mxu0 %v500
    %523 = vmatprep.subr.bf16.mxu0 0
    %524 = vmatpush1.bf16.msra.mxu0 %v501
    %525 = vmatprep.subr.bf16.mxu0 0
    %526 = vmatpush1.bf16.msra.mxu0 %v502
    %527 = vmatprep.subr.bf16.mxu0 0
    %528 = vmatpush1.bf16.msra.mxu0 0
    %529 = vmatprep.subr.bf16.mxu0 0
    %530 = vmatpush1.bf16.msra.mxu0 0
    %531 = vmatprep.subr.bf16.mxu0 0
    %532 = vmatpush1.bf16.msra.mxu0 0
    %533 = vmatprep.subr.bf16.mxu0 0
    %534 = vmatpush1.bf16.msra.mxu0 0
    %535 = vmatprep.subr.bf16.mxu0 0
    %536 = vmatpush1.bf16.msra.mxu0 0
    %537 = vmatprep.subr.bf16.mxu0 0
    %538 = vmatpush1.bf16.msra.mxu0 0
    %539 = vmatprep.subr.bf16.mxu0 0
    %540 = vmatpush1.bf16.msra.mxu0 0
    %541 = vmatprep.subr.bf16.mxu0 0
    %542 = vmatpush1.bf16.msra.mxu0 0
    %543 = vmatprep.mubr.bf16.mxu0 0
    %544 = vmatmul.mubr.bf16.gmra.mrb[0].mxu0 %v437
    %v545 = vpop.f32.mrb[0].mxu0
    %v546 = vadd.f32 %v461, %v545
    %v547 = vpop.f32.mrb[0].mxu0
    %v548 = vpop.f32.mrb[0].mxu0
    %v549 = vadd.f32 %v461, %v548
    %v550 = vpop.f32.mrb[0].mxu0
    %551 = vdwg.mxu0
    %v552 = vmax.f32 %v546, 0.0
    %v553 = vmax.f32 %v549, 0.0
    %v554 = vpack.c.bf16 %v553, %v552
    %555 = vmatprep.subr.bf16.mxu0 0
    %556 = vmatpush1.bf16.msra.mxu0 %v554
    %557 = vmatprep.subr.bf16.mxu0 0
    %558 = vmatpush1.bf16.msra.mxu0 0
    %559 = vmatprep.subr.bf16.mxu0 0
    %560 = vmatpush1.bf16.msra.mxu0 0
    %561 = vmatprep.subr.bf16.mxu0 0
    %562 = vmatpush1.bf16.msra.mxu0 0
    %563 = vmatprep.subr.bf16.mxu0 0
    %564 = vmatpush1.bf16.msra.mxu0 0
    %565 = vmatprep.subr.bf16.mxu0 0
    %566 = vmatpush1.bf16.msra.mxu0 0
    %567 = vmatprep.subr.bf16.mxu0 0
    %568 = vmatpush1.bf16.msra.mxu0 0
    %569 = vmatprep.subr.bf16.mxu0 0
    %570 = vmatpush1.bf16.msra.mxu0 0
    %571 = vmatprep.subr.bf16.mxu0 0
    %572 = vmatpush1.bf16.msra.mxu0 0
    %573 = vmatprep.subr.bf16.mxu0 0
    %574 = vmatpush1.bf16.msra.mxu0 0
    %575 = vmatprep.subr.bf16.mxu0 0
    %576 = vmatpush1.bf16.msra.mxu0 0
    %577 = vmatprep.subr.bf16.mxu0 0
    %578 = vmatpush1.bf16.msra.mxu0 0
    %579 = vmatprep.subr.bf16.mxu0 0
    %580 = vmatpush1.bf16.msra.mxu0 0
    %581 = vmatprep.subr.bf16.mxu0 0
    %582 = vmatpush1.bf16.msra.mxu0 0
    %583 = vmatprep.subr.bf16.mxu0 0
    %584 = vmatpush1.bf16.msra.mxu0 0
    %585 = vmatprep.subr.bf16.mxu0 0
    %586 = vmatpush1.bf16.msra.mxu0 0
    %587 = vmatprep.mubr.bf16.mxu0 0
    %588 = vmatmul.mubr.bf16.gmra.mrb[0].mxu0 %v277
    %v589 = vpop.f32.mrb[0].mxu0
    %v590 = vadd.f32 %v552, %v589
    %v591 = vpop.f32.mrb[0].mxu0
    %v592 = vpop.f32.mrb[0].mxu0
    %v593 = vadd.f32 %v553, %v592
    %v594 = vpop.f32.mrb[0].mxu0
    %595 = vdwg.mxu0
    %v596 = vpack.c.bf16 %v593, %v590
    %s597 = scalar_lea.vmem [#allocation2], 256
    %v598 = vld [vmem:[%s597] sm:$0xf]
    %v599 = vld [vmem:[%s597 + $0x4] sm:$0xf]
    %v600 = vld [vmem:[%s597 + $0x8] sm:$0xf]
    %v601 = vld [vmem:[%s597 + $0xc] sm:$0xf]
    %v602 = vld [vmem:[%s597 + $0x10] sm:$0xf]
    %v603 = vld [vmem:[%s597 + $0x14] sm:$0xf]
    %v604 = vld [vmem:[%s597 + $0x18] sm:$0xf]
    %v605 = vld [vmem:[%s597 + $0x1c] sm:$0xf]
    %v606 = vld [vmem:[%s597 + $0x20] sm:$0xf]
    %v607 = vld [vmem:[%s597 + $0x24] sm:$0xf]
    %v608 = vld [vmem:[%s597 + $0x28] sm:$0xf]
    %v609 = vld [vmem:[%s597 + $0x2c] sm:$0xf]
    %v610 = vld [vmem:[%s597 + $0x30] sm:$0xf]
    %v611 = vld [vmem:[%s597 + $0x34] sm:$0xf]
    %v612 = vld [vmem:[%s597 + $0x38] sm:$0xf]
    %v613 = vld [vmem:[%s597 + $0x3c] sm:$0xf]
    %s614 = scalar_lea.vmem %s4, 4
    %v615 = vld [vmem:[%s614] sm:$0x1]
    %v617 = vlaneseq
    %v618 = vshrl.u32 %v617, 7
    %v619 = vsub.s32 0, %v618
    %v620 = vrot.slane %v615, %v619
    %v638 = vunpack.c.l.b16 %v598
    %v639 = vunpack.c.l.b16 %v599
    %v640 = vunpack.c.l.b16 %v600
    %v641 = vunpack.c.l.b16 %v601
    %v642 = vunpack.c.l.b16 %v602
    %v643 = vunpack.c.l.b16 %v603
    %v644 = vunpack.c.l.b16 %v604
    %v645 = vunpack.c.l.b16 %v605
    %v646 = vunpack.c.l.b16 %v606
    %v647 = vunpack.c.l.b16 %v607
    %v648 = vunpack.c.l.b16 %v608
    %v649 = vunpack.c.l.b16 %v609
    %v650 = vunpack.c.l.b16 %v610
    %v651 = vunpack.c.l.b16 %v611
    %v652 = vunpack.c.l.b16 %v612
    %v653 = vunpack.c.l.b16 %v613
    %v654 = vpack.c.b16 %v639, %v638
    %v655 = vpack.c.b16 %v641, %v640
    %v656 = vpack.c.b16 %v643, %v642
    %v657 = vpack.c.b16 %v645, %v644
    %v658 = vpack.c.b16 %v647, %v646
    %v659 = vpack.c.b16 %v649, %v648
    %v660 = vpack.c.b16 %v651, %v650
    %v661 = vpack.c.b16 %v653, %v652
    %670 = vmatprep.subr.bf16.mxu0 0
    %671 = vmatpush1.bf16.msra.mxu0 %v654
    %672 = vmatprep.subr.bf16.mxu0 0
    %673 = vmatpush1.bf16.msra.mxu0 %v655
    %674 = vmatprep.subr.bf16.mxu0 0
    %675 = vmatpush1.bf16.msra.mxu0 %v656
    %676 = vmatprep.subr.bf16.mxu0 0
    %677 = vmatpush1.bf16.msra.mxu0 %v657
    %678 = vmatprep.subr.bf16.mxu0 0
    %679 = vmatpush1.bf16.msra.mxu0 %v658
    %680 = vmatprep.subr.bf16.mxu0 0
    %681 = vmatpush1.bf16.msra.mxu0 %v659
    %682 = vmatprep.subr.bf16.mxu0 0
    %683 = vmatpush1.bf16.msra.mxu0 %v660
    %684 = vmatprep.subr.bf16.mxu0 0
    %685 = vmatpush1.bf16.msra.mxu0 %v661
    %686 = vmatprep.subr.bf16.mxu0 0
    %687 = vmatpush1.bf16.msra.mxu0 0
    %688 = vmatprep.subr.bf16.mxu0 0
    %689 = vmatpush1.bf16.msra.mxu0 0
    %690 = vmatprep.subr.bf16.mxu0 0
    %691 = vmatpush1.bf16.msra.mxu0 0
    %692 = vmatprep.subr.bf16.mxu0 0
    %693 = vmatpush1.bf16.msra.mxu0 0
    %694 = vmatprep.subr.bf16.mxu0 0
    %695 = vmatpush1.bf16.msra.mxu0 0
    %696 = vmatprep.subr.bf16.mxu0 0
    %697 = vmatpush1.bf16.msra.mxu0 0
    %698 = vmatprep.subr.bf16.mxu0 0
    %699 = vmatpush1.bf16.msra.mxu0 0
    %700 = vmatprep.subr.bf16.mxu0 0
    %701 = vmatpush1.bf16.msra.mxu0 0
    %702 = vmatprep.mubr.bf16.mxu0 0
    %703 = vmatmul.mubr.bf16.gmra.mrb[0].mxu0 %v596
    %v704 = vpop.f32.mrb[0].mxu0
    %v705 = vadd.f32 %v620, %v704
    %v706 = vpop.f32.mrb[0].mxu0
    %v707 = vpop.f32.mrb[0].mxu0
    %v708 = vadd.f32 %v620, %v707
    %v709 = vpop.f32.mrb[0].mxu0
    %710 = vdwg.mxu0
    %v711 = vmax.f32 %v705, 0.0
    %v712 = vmax.f32 %v708, 0.0
    %v713 = vpack.c.bf16 %v712, %v711
    %s714 = scalar_lea.vmem [#allocation2], 320
    %v715 = vld [vmem:[%s714] sm:$0xf]
    %v716 = vld [vmem:[%s714 + $0x4] sm:$0xf]
    %v717 = vld [vmem:[%s714 + $0x8] sm:$0xf]
    %v718 = vld [vmem:[%s714 + $0xc] sm:$0xf]
    %v719 = vld [vmem:[%s714 + $0x10] sm:$0xf]
    %v720 = vld [vmem:[%s714 + $0x14] sm:$0xf]
    %v721 = vld [vmem:[%s714 + $0x18] sm:$0xf]
    %v722 = vld [vmem:[%s714 + $0x1c] sm:$0xf]
    %v723 = vld [vmem:[%s714 + $0x20] sm:$0xf]
    %v724 = vld [vmem:[%s714 + $0x24] sm:$0xf]
    %v725 = vld [vmem:[%s714 + $0x28] sm:$0xf]
    %v726 = vld [vmem:[%s714 + $0x2c] sm:$0xf]
    %v727 = vld [vmem:[%s714 + $0x30] sm:$0xf]
    %v728 = vld [vmem:[%s714 + $0x34] sm:$0xf]
    %v729 = vld [vmem:[%s714 + $0x38] sm:$0xf]
    %v730 = vld [vmem:[%s714 + $0x3c] sm:$0xf]
    %s731 = scalar_lea.vmem %s4, 5
    %v732 = vld [vmem:[%s731] sm:$0x1]
    %v734 = vlaneseq
    %v735 = vshrl.u32 %v734, 7
    %v736 = vsub.s32 0, %v735
    %v737 = vrot.slane %v732, %v736
    %v755 = vunpack.c.l.b16 %v715
    %v756 = vunpack.c.l.b16 %v716
    %v757 = vunpack.c.l.b16 %v717
    %v758 = vunpack.c.l.b16 %v718
    %v759 = vunpack.c.l.b16 %v719
    %v760 = vunpack.c.l.b16 %v720
    %v761 = vunpack.c.l.b16 %v721
    %v762 = vunpack.c.l.b16 %v722
    %v763 = vunpack.c.l.b16 %v723
    %v764 = vunpack.c.l.b16 %v724
    %v765 = vunpack.c.l.b16 %v725
    %v766 = vunpack.c.l.b16 %v726
    %v767 = vunpack.c.l.b16 %v727
    %v768 = vunpack.c.l.b16 %v728
    %v769 = vunpack.c.l.b16 %v729
    %v770 = vunpack.c.l.b16 %v730
    %v771 = vpack.c.b16 %v756, %v755
    %v772 = vpack.c.b16 %v758, %v757
    %v773 = vpack.c.b16 %v760, %v759
    %v774 = vpack.c.b16 %v762, %v761
    %v775 = vpack.c.b16 %v764, %v763
    %v776 = vpack.c.b16 %v766, %v765
    %v777 = vpack.c.b16 %v768, %v767
    %v778 = vpack.c.b16 %v770, %v769
    %787 = vmatprep.subr.bf16.mxu0 0
    %788 = vmatpush1.bf16.msra.mxu0 %v771
    %789 = vmatprep.subr.bf16.mxu0 0
    %790 = vmatpush1.bf16.msra.mxu0 %v772
    %791 = vmatprep.subr.bf16.mxu0 0
    %792 = vmatpush1.bf16.msra.mxu0 %v773
    %793 = vmatprep.subr.bf16.mxu0 0
    %794 = vmatpush1.bf16.msra.mxu0 %v774
    %795 = vmatprep.subr.bf16.mxu0 0
    %796 = vmatpush1.bf16.msra.mxu0 %v775
    %797 = vmatprep.subr.bf16.mxu0 0
    %798 = vmatpush1.bf16.msra.mxu0 %v776
    %799 = vmatprep.subr.bf16.mxu0 0
    %800 = vmatpush1.bf16.msra.mxu0 %v777
    %801 = vmatprep.subr.bf16.mxu0 0
    %802 = vmatpush1.bf16.msra.mxu0 %v778
    %803 = vmatprep.subr.bf16.mxu0 0
    %804 = vmatpush1.bf16.msra.mxu0 0
    %805 = vmatprep.subr.bf16.mxu0 0
    %806 = vmatpush1.bf16.msra.mxu0 0
    %807 = vmatprep.subr.bf16.mxu0 0
    %808 = vmatpush1.bf16.msra.mxu0 0
    %809 = vmatprep.subr.bf16.mxu0 0
    %810 = vmatpush1.bf16.msra.mxu0 0
    %811 = vmatprep.subr.bf16.mxu0 0
    %812 = vmatpush1.bf16.msra.mxu0 0
    %813 = vmatprep.subr.bf16.mxu0 0
    %814 = vmatpush1.bf16.msra.mxu0 0
    %815 = vmatprep.subr.bf16.mxu0 0
    %816 = vmatpush1.bf16.msra.mxu0 0
    %817 = vmatprep.subr.bf16.mxu0 0
    %818 = vmatpush1.bf16.msra.mxu0 0
    %819 = vmatprep.mubr.bf16.mxu0 0
    %820 = vmatmul.mubr.bf16.gmra.mrb[0].mxu0 %v713
    %v821 = vpop.f32.mrb[0].mxu0
    %v822 = vadd.f32 %v737, %v821
    %v823 = vpop.f32.mrb[0].mxu0
    %v824 = vpop.f32.mrb[0].mxu0
    %v825 = vadd.f32 %v737, %v824
    %v826 = vpop.f32.mrb[0].mxu0
    %827 = vdwg.mxu0
    %v828 = vmax.f32 %v822, 0.0
    %v829 = vmax.f32 %v825, 0.0
    %v830 = vpack.c.bf16 %v829, %v828
    %831 = vmatprep.subr.bf16.mxu0 0
    %832 = vmatpush1.bf16.msra.mxu0 %v830
    %833 = vmatprep.subr.bf16.mxu0 0
    %834 = vmatpush1.bf16.msra.mxu0 0
    %835 = vmatprep.subr.bf16.mxu0 0
    %836 = vmatpush1.bf16.msra.mxu0 0
    %837 = vmatprep.subr.bf16.mxu0 0
    %838 = vmatpush1.bf16.msra.mxu0 0
    %839 = vmatprep.subr.bf16.mxu0 0
    %840 = vmatpush1.bf16.msra.mxu0 0
    %841 = vmatprep.subr.bf16.mxu0 0
    %842 = vmatpush1.bf16.msra.mxu0 0
    %843 = vmatprep.subr.bf16.mxu0 0
    %844 = vmatpush1.bf16.msra.mxu0 0
    %845 = vmatprep.subr.bf16.mxu0 0
    %846 = vmatpush1.bf16.msra.mxu0 0
    %847 = vmatprep.subr.bf16.mxu0 0
    %848 = vmatpush1.bf16.msra.mxu0 0
    %849 = vmatprep.subr.bf16.mxu0 0
    %850 = vmatpush1.bf16.msra.mxu0 0
    %851 = vmatprep.subr.bf16.mxu0 0
    %852 = vmatpush1.bf16.msra.mxu0 0
    %853 = vmatprep.subr.bf16.mxu0 0
    %854 = vmatpush1.bf16.msra.mxu0 0
    %855 = vmatprep.subr.bf16.mxu0 0
    %856 = vmatpush1.bf16.msra.mxu0 0
    %857 = vmatprep.subr.bf16.mxu0 0
    %858 = vmatpush1.bf16.msra.mxu0 0
    %859 = vmatprep.subr.bf16.mxu0 0
    %860 = vmatpush1.bf16.msra.mxu0 0
    %861 = vmatprep.subr.bf16.mxu0 0
    %862 = vmatpush1.bf16.msra.mxu0 0
    %863 = vmatprep.mubr.bf16.mxu0 0
    %864 = vmatmul.mubr.bf16.gmra.mrb[0].mxu0 %v277
    %v865 = vpop.f32.mrb[0].mxu0
    %v866 = vadd.f32 %v828, %v865
    %v867 = vpop.f32.mrb[0].mxu0
    %v868 = vpop.f32.mrb[0].mxu0
    %v869 = vadd.f32 %v829, %v868
    %v870 = vpop.f32.mrb[0].mxu0
    %871 = vdwg.mxu0
    %v872 = vpack.c.bf16 %v869, %v866
    %s873 = scalar_lea.vmem [#allocation2], 384
    %v874 = vld [vmem:[%s873] sm:$0xf]
    %v875 = vld [vmem:[%s873 + $0x4] sm:$0xf]
    %v876 = vld [vmem:[%s873 + $0x8] sm:$0xf]
    %v877 = vld [vmem:[%s873 + $0xc] sm:$0xf]
    %v878 = vld [vmem:[%s873 + $0x10] sm:$0xf]
    %v879 = vld [vmem:[%s873 + $0x14] sm:$0xf]
    %v880 = vld [vmem:[%s873 + $0x18] sm:$0xf]
    %v881 = vld [vmem:[%s873 + $0x1c] sm:$0xf]
    %v882 = vld [vmem:[%s873 + $0x20] sm:$0xf]
    %v883 = vld [vmem:[%s873 + $0x24] sm:$0xf]
    %v884 = vld [vmem:[%s873 + $0x28] sm:$0xf]
    %v885 = vld [vmem:[%s873 + $0x2c] sm:$0xf]
    %v886 = vld [vmem:[%s873 + $0x30] sm:$0xf]
    %v887 = vld [vmem:[%s873 + $0x34] sm:$0xf]
    %v888 = vld [vmem:[%s873 + $0x38] sm:$0xf]
    %v889 = vld [vmem:[%s873 + $0x3c] sm:$0xf]
    %s890 = scalar_lea.vmem %s4, 6
    %v891 = vld [vmem:[%s890] sm:$0x1]
    %v893 = vlaneseq
    %v894 = vshrl.u32 %v893, 7
    %v895 = vsub.s32 0, %v894
    %v896 = vrot.slane %v891, %v895
    %v914 = vunpack.c.l.b16 %v874
    %v915 = vunpack.c.l.b16 %v875
    %v916 = vunpack.c.l.b16 %v876
    %v917 = vunpack.c.l.b16 %v877
    %v918 = vunpack.c.l.b16 %v878
    %v919 = vunpack.c.l.b16 %v879
    %v920 = vunpack.c.l.b16 %v880
    %v921 = vunpack.c.l.b16 %v881
    %v922 = vunpack.c.l.b16 %v882
    %v923 = vunpack.c.l.b16 %v883
    %v924 = vunpack.c.l.b16 %v884
    %v925 = vunpack.c.l.b16 %v885
    %v926 = vunpack.c.l.b16 %v886
    %v927 = vunpack.c.l.b16 %v887
    %v928 = vunpack.c.l.b16 %v888
    %v929 = vunpack.c.l.b16 %v889
    %v930 = vpack.c.b16 %v915, %v914
    %v931 = vpack.c.b16 %v917, %v916
    %v932 = vpack.c.b16 %v919, %v918
    %v933 = vpack.c.b16 %v921, %v920
    %v934 = vpack.c.b16 %v923, %v922
    %v935 = vpack.c.b16 %v925, %v924
    %v936 = vpack.c.b16 %v927, %v926
    %v937 = vpack.c.b16 %v929, %v928
    %946 = vmatprep.subr.bf16.mxu0 0
    %947 = vmatpush1.bf16.msra.mxu0 %v930
    %948 = vmatprep.subr.bf16.mxu0 0
    %949 = vmatpush1.bf16.msra.mxu0 %v931
    %950 = vmatprep.subr.bf16.mxu0 0
    %951 = vmatpush1.bf16.msra.mxu0 %v932
    %952 = vmatprep.subr.bf16.mxu0 0
    %953 = vmatpush1.bf16.msra.mxu0 %v933
    %954 = vmatprep.subr.bf16.mxu0 0
    %955 = vmatpush1.bf16.msra.mxu0 %v934
    %956 = vmatprep.subr.bf16.mxu0 0
    %957 = vmatpush1.bf16.msra.mxu0 %v935
    %958 = vmatprep.subr.bf16.mxu0 0
    %959 = vmatpush1.bf16.msra.mxu0 %v936
    %960 = vmatprep.subr.bf16.mxu0 0
    %961 = vmatpush1.bf16.msra.mxu0 %v937
    %962 = vmatprep.subr.bf16.mxu0 0
    %963 = vmatpush1.bf16.msra.mxu0 0
    %964 = vmatprep.subr.bf16.mxu0 0
    %965 = vmatpush1.bf16.msra.mxu0 0
    %966 = vmatprep.subr.bf16.mxu0 0
    %967 = vmatpush1.bf16.msra.mxu0 0
    %968 = vmatprep.subr.bf16.mxu0 0
    %969 = vmatpush1.bf16.msra.mxu0 0
    %970 = vmatprep.subr.bf16.mxu0 0
    %971 = vmatpush1.bf16.msra.mxu0 0
    %972 = vmatprep.subr.bf16.mxu0 0
    %973 = vmatpush1.bf16.msra.mxu0 0
    %974 = vmatprep.subr.bf16.mxu0 0
    %975 = vmatpush1.bf16.msra.mxu0 0
    %976 = vmatprep.subr.bf16.mxu0 0
    %977 = vmatpush1.bf16.msra.mxu0 0
    %978 = vmatprep.mubr.bf16.mxu0 0
    %979 = vmatmul.mubr.bf16.gmra.mrb[0].mxu0 %v872
    %v980 = vpop.f32.mrb[0].mxu0
    %v981 = vadd.f32 %v896, %v980
    %v982 = vpop.f32.mrb[0].mxu0
    %v983 = vpop.f32.mrb[0].mxu0
    %v984 = vadd.f32 %v896, %v983
    %v985 = vpop.f32.mrb[0].mxu0
    %986 = vdwg.mxu0
    %v987 = vmax.f32 %v981, 0.0
    %v988 = vmax.f32 %v984, 0.0
    %v989 = vpack.c.bf16 %v988, %v987
    %s990 = scalar_lea.vmem [#allocation2], 448
    %v991 = vld [vmem:[%s990] sm:$0xf]
    %v992 = vld [vmem:[%s990 + $0x4] sm:$0xf]
    %v993 = vld [vmem:[%s990 + $0x8] sm:$0xf]
    %v994 = vld [vmem:[%s990 + $0xc] sm:$0xf]
    %v995 = vld [vmem:[%s990 + $0x10] sm:$0xf]
    %v996 = vld [vmem:[%s990 + $0x14] sm:$0xf]
    %v997 = vld [vmem:[%s990 + $0x18] sm:$0xf]
    %v998 = vld [vmem:[%s990 + $0x1c] sm:$0xf]
    %v999 = vld [vmem:[%s990 + $0x20] sm:$0xf]
    %v1000 = vld [vmem:[%s990 + $0x24] sm:$0xf]
    %v1001 = vld [vmem:[%s990 + $0x28] sm:$0xf]
    %v1002 = vld [vmem:[%s990 + $0x2c] sm:$0xf]
    %v1003 = vld [vmem:[%s990 + $0x30] sm:$0xf]
    %v1004 = vld [vmem:[%s990 + $0x34] sm:$0xf]
    %v1005 = vld [vmem:[%s990 + $0x38] sm:$0xf]
    %v1006 = vld [vmem:[%s990 + $0x3c] sm:$0xf]
    %s1007 = scalar_lea.vmem %s4, 7
    %v1008 = vld [vmem:[%s1007] sm:$0x1]
    %v1010 = vlaneseq
    %v1011 = vshrl.u32 %v1010, 7
    %v1012 = vsub.s32 0, %v1011
    %v1013 = vrot.slane %v1008, %v1012
    %v1031 = vunpack.c.l.b16 %v991
    %v1032 = vunpack.c.l.b16 %v992
    %v1033 = vunpack.c.l.b16 %v993
    %v1034 = vunpack.c.l.b16 %v994
    %v1035 = vunpack.c.l.b16 %v995
    %v1036 = vunpack.c.l.b16 %v996
    %v1037 = vunpack.c.l.b16 %v997
    %v1038 = vunpack.c.l.b16 %v998
    %v1039 = vunpack.c.l.b16 %v999
    %v1040 = vunpack.c.l.b16 %v1000
    %v1041 = vunpack.c.l.b16 %v1001
    %v1042 = vunpack.c.l.b16 %v1002
    %v1043 = vunpack.c.l.b16 %v1003
    %v1044 = vunpack.c.l.b16 %v1004
    %v1045 = vunpack.c.l.b16 %v1005
    %v1046 = vunpack.c.l.b16 %v1006
    %v1047 = vpack.c.b16 %v1032, %v1031
    %v1048 = vpack.c.b16 %v1034, %v1033
    %v1049 = vpack.c.b16 %v1036, %v1035
    %v1050 = vpack.c.b16 %v1038, %v1037
    %v1051 = vpack.c.b16 %v1040, %v1039
    %v1052 = vpack.c.b16 %v1042, %v1041
    %v1053 = vpack.c.b16 %v1044, %v1043
    %v1054 = vpack.c.b16 %v1046, %v1045
    %1063 = vmatprep.subr.bf16.mxu0 0
    %1064 = vmatpush1.bf16.msra.mxu0 %v1047
    %1065 = vmatprep.subr.bf16.mxu0 0
    %1066 = vmatpush1.bf16.msra.mxu0 %v1048
    %1067 = vmatprep.subr.bf16.mxu0 0
    %1068 = vmatpush1.bf16.msra.mxu0 %v1049
    %1069 = vmatprep.subr.bf16.mxu0 0
    %1070 = vmatpush1.bf16.msra.mxu0 %v1050
    %1071 = vmatprep.subr.bf16.mxu0 0
    %1072 = vmatpush1.bf16.msra.mxu0 %v1051
    %1073 = vmatprep.subr.bf16.mxu0 0
    %1074 = vmatpush1.bf16.msra.mxu0 %v1052
    %1075 = vmatprep.subr.bf16.mxu0 0
    %1076 = vmatpush1.bf16.msra.mxu0 %v1053
    %1077 = vmatprep.subr.bf16.mxu0 0
    %1078 = vmatpush1.bf16.msra.mxu0 %v1054
    %1079 = vmatprep.subr.bf16.mxu0 0
    %1080 = vmatpush1.bf16.msra.mxu0 0
    %1081 = vmatprep.subr.bf16.mxu0 0
    %1082 = vmatpush1.bf16.msra.mxu0 0
    %1083 = vmatprep.subr.bf16.mxu0 0
    %1084 = vmatpush1.bf16.msra.mxu0 0
    %1085 = vmatprep.subr.bf16.mxu0 0
    %1086 = vmatpush1.bf16.msra.mxu0 0
    %1087 = vmatprep.subr.bf16.mxu0 0
    %1088 = vmatpush1.bf16.msra.mxu0 0
    %1089 = vmatprep.subr.bf16.mxu0 0
    %1090 = vmatpush1.bf16.msra.mxu0 0
    %1091 = vmatprep.subr.bf16.mxu0 0
    %1092 = vmatpush1.bf16.msra.mxu0 0
    %1093 = vmatprep.subr.bf16.mxu0 0
    %1094 = vmatpush1.bf16.msra.mxu0 0
    %1095 = vmatprep.mubr.bf16.mxu0 0
    %1096 = vmatmul.mubr.bf16.gmra.mrb[0].mxu0 %v989
    %v1097 = vpop.f32.mrb[0].mxu0
    %v1098 = vadd.f32 %v1013, %v1097
    %v1099 = vpop.f32.mrb[0].mxu0
    %v1100 = vpop.f32.mrb[0].mxu0
    %v1101 = vadd.f32 %v1013, %v1100
    %v1102 = vpop.f32.mrb[0].mxu0
    %1103 = vdwg.mxu0
    %v1104 = vmax.f32 %v1098, 0.0
    %v1105 = vmax.f32 %v1101, 0.0
    %v1106 = vld [vmem:[%s2] sm:$0xf]
    %v1107 = vpack.c.bf16 %v1105, %v1104
    %v1109 = vsel %vm275, %v1106, 0
    %1111 = vmatprep.subr.bf16.mxu0 0
    %1112 = vmatpush1.bf16.msra.mxu0 %v1107
    %1113 = vmatprep.subr.bf16.mxu0 0
    %1114 = vmatpush1.bf16.msra.mxu0 0
    %1115 = vmatprep.subr.bf16.mxu0 0
    %1116 = vmatpush1.bf16.msra.mxu0 0
    %1117 = vmatprep.subr.bf16.mxu0 0
    %1118 = vmatpush1.bf16.msra.mxu0 0
    %1119 = vmatprep.subr.bf16.mxu0 0
    %1120 = vmatpush1.bf16.msra.mxu0 0
    %1121 = vmatprep.subr.bf16.mxu0 0
    %1122 = vmatpush1.bf16.msra.mxu0 0
    %1123 = vmatprep.subr.bf16.mxu0 0
    %1124 = vmatpush1.bf16.msra.mxu0 0
    %1125 = vmatprep.subr.bf16.mxu0 0
    %1126 = vmatpush1.bf16.msra.mxu0 0
    %1127 = vmatprep.subr.bf16.mxu0 0
    %1128 = vmatpush1.bf16.msra.mxu0 0
    %1129 = vmatprep.subr.bf16.mxu0 0
    %1130 = vmatpush1.bf16.msra.mxu0 0
    %1131 = vmatprep.subr.bf16.mxu0 0
    %1132 = vmatpush1.bf16.msra.mxu0 0
    %1133 = vmatprep.subr.bf16.mxu0 0
    %1134 = vmatpush1.bf16.msra.mxu0 0
    %1135 = vmatprep.subr.bf16.mxu0 0
    %1136 = vmatpush1.bf16.msra.mxu0 0
    %1137 = vmatprep.subr.bf16.mxu0 0
    %1138 = vmatpush1.bf16.msra.mxu0 0
    %1139 = vmatprep.subr.bf16.mxu0 0
    %1140 = vmatpush1.bf16.msra.mxu0 0
    %1141 = vmatprep.subr.bf16.mxu0 0
    %1142 = vmatpush1.bf16.msra.mxu0 0
    %1143 = vmatprep.mubr.bf16.mxu0 0
    %1144 = vmatmul.mubr.bf16.gmra.mrb[0].mxu0 %v1109
    %v1145 = vpop.f32.mrb[0].mxu0
    %v1146 = vadd.f32 0.0, %v1145
    %v1147 = vpop.f32.mrb[0].mxu0
    %v1148 = vpop.f32.mrb[0].mxu0
    %v1149 = vpop.f32.mrb[0].mxu0
    %1150 = vdwg.mxu0
    %v1151 = vpack.c.bf16 %v1146, %v1146
    %s1152 = scalar_lea.vmem [#allocation2], 512
    %v1153 = vld [vmem:[%s1152] sm:$0xf]
    %v1154 = vld [vmem:[%s1152 + $0x4] sm:$0xf]
    %v1155 = vld [vmem:[%s1152 + $0x8] sm:$0xf]
    %v1156 = vld [vmem:[%s1152 + $0xc] sm:$0xf]
    %v1157 = vld [vmem:[%s1152 + $0x10] sm:$0xf]
    %v1158 = vld [vmem:[%s1152 + $0x14] sm:$0xf]
    %v1159 = vld [vmem:[%s1152 + $0x18] sm:$0xf]
    %v1160 = vld [vmem:[%s1152 + $0x1c] sm:$0xf]
    %v1161 = vld [vmem:[%s1152 + $0x20] sm:$0xf]
    %v1162 = vld [vmem:[%s1152 + $0x24] sm:$0xf]
    %v1163 = vld [vmem:[%s1152 + $0x28] sm:$0xf]
    %v1164 = vld [vmem:[%s1152 + $0x2c] sm:$0xf]
    %v1165 = vld [vmem:[%s1152 + $0x30] sm:$0xf]
    %v1166 = vld [vmem:[%s1152 + $0x34] sm:$0xf]
    %v1167 = vld [vmem:[%s1152 + $0x38] sm:$0xf]
    %v1168 = vld [vmem:[%s1152 + $0x3c] sm:$0xf]
    %s1169 = scalar_lea.vmem %s4, 8
    %v1170 = vld [vmem:[%s1169] sm:$0x1]
    %v1172 = vlaneseq
    %v1173 = vshrl.u32 %v1172, 7
    %v1174 = vsub.s32 0, %v1173
    %v1175 = vrot.slane %v1170, %v1174
    %v1193 = vunpack.c.l.b16 %v1153
    %v1194 = vunpack.c.l.b16 %v1154
    %v1195 = vunpack.c.l.b16 %v1155
    %v1196 = vunpack.c.l.b16 %v1156
    %v1197 = vunpack.c.l.b16 %v1157
    %v1198 = vunpack.c.l.b16 %v1158
    %v1199 = vunpack.c.l.b16 %v1159
    %v1200 = vunpack.c.l.b16 %v1160
    %v1201 = vunpack.c.l.b16 %v1161
    %v1202 = vunpack.c.l.b16 %v1162
    %v1203 = vunpack.c.l.b16 %v1163
    %v1204 = vunpack.c.l.b16 %v1164
    %v1205 = vunpack.c.l.b16 %v1165
    %v1206 = vunpack.c.l.b16 %v1166
    %v1207 = vunpack.c.l.b16 %v1167
    %v1208 = vunpack.c.l.b16 %v1168
    %v1209 = vpack.c.b16 %v1194, %v1193
    %v1210 = vpack.c.b16 %v1196, %v1195
    %v1211 = vpack.c.b16 %v1198, %v1197
    %v1212 = vpack.c.b16 %v1200, %v1199
    %v1213 = vpack.c.b16 %v1202, %v1201
    %v1214 = vpack.c.b16 %v1204, %v1203
    %v1215 = vpack.c.b16 %v1206, %v1205
    %v1216 = vpack.c.b16 %v1208, %v1207
    %1225 = vmatprep.subr.bf16.mxu0 0
    %1226 = vmatpush1.bf16.msra.mxu0 %v1209
    %1227 = vmatprep.subr.bf16.mxu0 0
    %1228 = vmatpush1.bf16.msra.mxu0 %v1210
    %1229 = vmatprep.subr.bf16.mxu0 0
    %1230 = vmatpush1.bf16.msra.mxu0 %v1211
    %1231 = vmatprep.subr.bf16.mxu0 0
    %1232 = vmatpush1.bf16.msra.mxu0 %v1212
    %1233 = vmatprep.subr.bf16.mxu0 0
    %1234 = vmatpush1.bf16.msra.mxu0 %v1213
    %1235 = vmatprep.subr.bf16.mxu0 0
    %1236 = vmatpush1.bf16.msra.mxu0 %v1214
    %1237 = vmatprep.subr.bf16.mxu0 0
    %1238 = vmatpush1.bf16.msra.mxu0 %v1215
    %1239 = vmatprep.subr.bf16.mxu0 0
    %1240 = vmatpush1.bf16.msra.mxu0 %v1216
    %1241 = vmatprep.subr.bf16.mxu0 0
    %1242 = vmatpush1.bf16.msra.mxu0 0
    %1243 = vmatprep.subr.bf16.mxu0 0
    %1244 = vmatpush1.bf16.msra.mxu0 0
    %1245 = vmatprep.subr.bf16.mxu0 0
    %1246 = vmatpush1.bf16.msra.mxu0 0
    %1247 = vmatprep.subr.bf16.mxu0 0
    %1248 = vmatpush1.bf16.msra.mxu0 0
    %1249 = vmatprep.subr.bf16.mxu0 0
    %1250 = vmatpush1.bf16.msra.mxu0 0
    %1251 = vmatprep.subr.bf16.mxu0 0
    %1252 = vmatpush1.bf16.msra.mxu0 0
    %1253 = vmatprep.subr.bf16.mxu0 0
    %1254 = vmatpush1.bf16.msra.mxu0 0
    %1255 = vmatprep.subr.bf16.mxu0 0
    %1256 = vmatpush1.bf16.msra.mxu0 0
    %1257 = vmatprep.mubr.bf16.mxu0 0
    %1258 = vmatmul.mubr.bf16.gmra.mrb[0].mxu0 %v1151
    %v1259 = vpop.f32.mrb[0].mxu0
    %v1260 = vadd.f32 %v1175, %v1259
    %v1261 = vpop.f32.mrb[0].mxu0
    %v1262 = vpop.f32.mrb[0].mxu0
    %v1263 = vpop.f32.mrb[0].mxu0
    %1264 = vdwg.mxu0
    %v1265 = vmax.f32 %v1260, 0.0
    %v1266 = vpack.c.bf16 %v1265, %v1265
    %s1267 = scalar_lea.vmem [#allocation2], 576
    %v1268 = vld [vmem:[%s1267] sm:$0xf]
    %v1269 = vld [vmem:[%s1267 + $0x4] sm:$0xf]
    %v1270 = vld [vmem:[%s1267 + $0x8] sm:$0xf]
    %v1271 = vld [vmem:[%s1267 + $0xc] sm:$0xf]
    %v1272 = vld [vmem:[%s1267 + $0x10] sm:$0xf]
    %v1273 = vld [vmem:[%s1267 + $0x14] sm:$0xf]
    %v1274 = vld [vmem:[%s1267 + $0x18] sm:$0xf]
    %v1275 = vld [vmem:[%s1267 + $0x1c] sm:$0xf]
    %v1276 = vld [vmem:[%s1267 + $0x20] sm:$0xf]
    %v1277 = vld [vmem:[%s1267 + $0x24] sm:$0xf]
    %v1278 = vld [vmem:[%s1267 + $0x28] sm:$0xf]
    %v1279 = vld [vmem:[%s1267 + $0x2c] sm:$0xf]
    %v1280 = vld [vmem:[%s1267 + $0x30] sm:$0xf]
    %v1281 = vld [vmem:[%s1267 + $0x34] sm:$0xf]
    %v1282 = vld [vmem:[%s1267 + $0x38] sm:$0xf]
    %v1283 = vld [vmem:[%s1267 + $0x3c] sm:$0xf]
    %s1284 = scalar_lea.vmem %s4, 9
    %v1285 = vld [vmem:[%s1284] sm:$0x1]
    %v1287 = vlaneseq
    %v1288 = vshrl.u32 %v1287, 7
    %v1289 = vsub.s32 0, %v1288
    %v1290 = vrot.slane %v1285, %v1289
    %v1308 = vunpack.c.l.b16 %v1268
    %v1309 = vunpack.c.l.b16 %v1269
    %v1310 = vunpack.c.l.b16 %v1270
    %v1311 = vunpack.c.l.b16 %v1271
    %v1312 = vunpack.c.l.b16 %v1272
    %v1313 = vunpack.c.l.b16 %v1273
    %v1314 = vunpack.c.l.b16 %v1274
    %v1315 = vunpack.c.l.b16 %v1275
    %v1316 = vunpack.c.l.b16 %v1276
    %v1317 = vunpack.c.l.b16 %v1277
    %v1318 = vunpack.c.l.b16 %v1278
    %v1319 = vunpack.c.l.b16 %v1279
    %v1320 = vunpack.c.l.b16 %v1280
    %v1321 = vunpack.c.l.b16 %v1281
    %v1322 = vunpack.c.l.b16 %v1282
    %v1323 = vunpack.c.l.b16 %v1283
    %v1324 = vpack.c.b16 %v1309, %v1308
    %v1325 = vpack.c.b16 %v1311, %v1310
    %v1326 = vpack.c.b16 %v1313, %v1312
    %v1327 = vpack.c.b16 %v1315, %v1314
    %v1328 = vpack.c.b16 %v1317, %v1316
    %v1329 = vpack.c.b16 %v1319, %v1318
    %v1330 = vpack.c.b16 %v1321, %v1320
    %v1331 = vpack.c.b16 %v1323, %v1322
    %1340 = vmatprep.subr.bf16.mxu0 0
    %1341 = vmatpush1.bf16.msra.mxu0 %v1324
    %1342 = vmatprep.subr.bf16.mxu0 0
    %1343 = vmatpush1.bf16.msra.mxu0 %v1325
    %1344 = vmatprep.subr.bf16.mxu0 0
    %1345 = vmatpush1.bf16.msra.mxu0 %v1326
    %1346 = vmatprep.subr.bf16.mxu0 0
    %1347 = vmatpush1.bf16.msra.mxu0 %v1327
    %1348 = vmatprep.subr.bf16.mxu0 0
    %1349 = vmatpush1.bf16.msra.mxu0 %v1328
    %1350 = vmatprep.subr.bf16.mxu0 0
    %1351 = vmatpush1.bf16.msra.mxu0 %v1329
    %1352 = vmatprep.subr.bf16.mxu0 0
    %1353 = vmatpush1.bf16.msra.mxu0 %v1330
    %1354 = vmatprep.subr.bf16.mxu0 0
    %1355 = vmatpush1.bf16.msra.mxu0 %v1331
    %1356 = vmatprep.subr.bf16.mxu0 0
    %1357 = vmatpush1.bf16.msra.mxu0 0
    %1358 = vmatprep.subr.bf16.mxu0 0
    %1359 = vmatpush1.bf16.msra.mxu0 0
    %1360 = vmatprep.subr.bf16.mxu0 0
    %1361 = vmatpush1.bf16.msra.mxu0 0
    %1362 = vmatprep.subr.bf16.mxu0 0
    %1363 = vmatpush1.bf16.msra.mxu0 0
    %1364 = vmatprep.subr.bf16.mxu0 0
    %1365 = vmatpush1.bf16.msra.mxu0 0
    %1366 = vmatprep.subr.bf16.mxu0 0
    %1367 = vmatpush1.bf16.msra.mxu0 0
    %1368 = vmatprep.subr.bf16.mxu0 0
    %1369 = vmatpush1.bf16.msra.mxu0 0
    %1370 = vmatprep.subr.bf16.mxu0 0
    %1371 = vmatpush1.bf16.msra.mxu0 0
    %1372 = vmatprep.mubr.bf16.mxu0 0
    %1373 = vmatmul.mubr.bf16.gmra.mrb[0].mxu0 %v1266
    %v1374 = vpop.f32.mrb[0].mxu0
    %v1375 = vadd.f32 %v1290, %v1374
    %v1376 = vpop.f32.mrb[0].mxu0
    %v1377 = vpop.f32.mrb[0].mxu0
    %v1378 = vpop.f32.mrb[0].mxu0
    %1379 = vdwg.mxu0
    %1380 = vst [vmem:[%s5] sm:$0xff] %v1375
    // Predicated region
    $region26: #{gin_forward.1} parent=1 // pred_check
      _
    $region27: #{gin_forward.1} parent=1 // pred_check_branch
      %1382 = sbr.rel (0) target = $region29
    $region28: #{gin_forward.1} parent=1 // pred_region
      _
    $region29: #{gin_forward.1} parent=1 // pred_fallthru
      _
    // Predicated region
    $region30: #{gin_forward.1} parent=1 // pred_check
      _
    $region31: #{gin_forward.1} parent=1 // pred_check_branch
      %1384 = sbr.rel (0) target = $region33
    $region32: #{gin_forward.1} parent=1 // pred_region
      _
    $region33: #{gin_forward.1} parent=1 // pred_fallthru
      _
    %1385 = vsyncpa [#allocation3], 1

</llo_original>
